<compile_context>
chip_gen: v6e
topology: v6e:2x2x1
jax: 0.10.0
libtpu: 0.0.40
codegen_flags: <defaults>
</compile_context>

<pallas_src>
import functools

import jax
import jax.numpy as jnp
import numpy as np
from jax.experimental import pallas as pl
from jax.experimental.pallas import tpu as pltpu

EMB_DIM = 32                              # D
NUM_LAYER = 2                             # L
N_NODES = 8                               # nodes per graph
N_EDGES = 16                              # edges per graph
N_GRAPHS = 32                             # graphs in the batch (disjoint union)
GRAPHS_PER_BLOCK = 16                     # graphs per grid step
N_BLOCK = GRAPHS_PER_BLOCK * N_NODES      # 128 nodes per block  (lane-dense)
E_BLOCK = GRAPHS_PER_BLOCK * N_EDGES      # 256 edges per block
TOTAL_N = N_GRAPHS * N_NODES              # 256
TOTAL_E = N_GRAPHS * N_EDGES              # 512
ATOM_FEATURE_DIMS = (16, 4, 4)            # synthetic vocab sizes for AtomEncoder columns
BOND_FEATURE_DIMS = (4, 3)                # synthetic vocab sizes for BondEncoder columns
BN_EPS = 1e-5


# ----------------------------- Pallas kernel -----------------------------

def gnn_fused_kernel(x_ref,        # VMEM [D, N_BLOCK]          node features (transposed)
                     src_ref,      # VMEM [1, E_BLOCK] int32    block-local source node ids
                     dst_ref,      # VMEM [E_BLOCK, 1] int32    block-local dest node ids
                     eemb_ref,     # VMEM [L, D, E_BLOCK]       per-layer bond embeddings (transposed)
                     w_ref,        # VMEM [L, 2D, 4D]           packed slab: W1t|b1t|1+eps|b2t|W2t
                     out_ref,      # VMEM [D, N_BLOCK]
                     *, num_layer, emb_dim):
    d = emb_dim
    n_blk = x_ref.shape[1]
    e_blk = src_ref.shape[1]

    # Build gather / scatter one-hot matrices on-chip (iota + compare; VPU work is free here).
    row_iota = jax.lax.broadcasted_iota(jnp.int32, (n_blk, e_blk), 0)
    s_t = (row_iota == src_ref[...]).astype(jnp.float32)        # [N, E], S_t[n, e] = (src[e] == n)
    col_iota = jax.lax.broadcasted_iota(jnp.int32, (e_blk, n_blk), 1)
    d_oh = (col_iota == dst_ref[...]).astype(jnp.float32)       # [E, N], D[e, n] = (dst[e] == n)

    h = x_ref[...]                                              # [D, N]
    for layer in range(num_layer):                              # static unroll; h stays on-chip
        w1t = w_ref[layer, 0:2 * d, 0:d]                        # [2D, D]   (BN1 folded)
        b1t = w_ref[layer, 0:2 * d, d:d + 1]                    # [2D, 1]
        ope = w_ref[layer, 0:d, d + 1:d + 2]                    # [D, 1]    (1 + eps)
        b2t = w_ref[layer, 0:d, d + 2:d + 3]                    # [D, 1]
        w2t = w_ref[layer, 0:d, 2 * d:4 * d]                    # [D, 2D]   (outer BN folded)

        # message: relu(x_j + bond_emb); gather expressed as an MXU matmul against the one-hot
        x_j = jnp.dot(h, s_t, preferred_element_type=jnp.float32)        # [D, E]
        msg = jnp.maximum(x_j + eemb_ref[layer], 0.0)                    # [D, E]
        # scatter-add to destination nodes via one-hot matmul
        agg = jnp.dot(msg, d_oh, preferred_element_type=jnp.float32)     # [D, N]
        # GIN combine
        z = ope * h + agg                                                # [D, N]
        # MLP (BNs folded): Linear -> ReLU -> Linear; then ReLU on all but the last layer
        h1 = jnp.maximum(jnp.dot(w1t, z, preferred_element_type=jnp.float32) + b1t, 0.0)   # [2D, N]
        h2 = jnp.dot(w2t, h1, preferred_element_type=jnp.float32) + b2t                    # [D, N]
        if layer < num_layer - 1:
            h2 = jnp.maximum(h2, 0.0)
        h = h2
    out_ref[...] = h


def gnn_pallas(xT, src, dst, eembT, wslab):
    d, total_n = xT.shape
    num_blocks = total_n // N_BLOCK
    num_layer = wslab.shape[0]
    kernel = functools.partial(gnn_fused_kernel, num_layer=num_layer, emb_dim=d)

    flops_per_blk_layer = (2 * d * N_BLOCK * E_BLOCK          # gather matmul
                           + 2 * d * E_BLOCK * N_BLOCK        # scatter matmul
                           + 2 * (2 * d) * d * N_BLOCK        # linear 1
                           + 2 * d * (2 * d) * N_BLOCK)       # linear 2
    flops = num_blocks * num_layer * flops_per_blk_layer
    bytes_accessed = 4 * (xT.size + eembT.size + wslab.size + src.size + dst.size + total_n * d)

    grid_spec = pltpu.PrefetchScalarGridSpec(
        num_scalar_prefetch=0,
        grid=(num_blocks,),
        in_specs=[
            pl.BlockSpec((d, N_BLOCK), lambda i: (0, i)),                    # xT
            pl.BlockSpec((1, E_BLOCK), lambda i: (0, i)),                    # src (block-local)
            pl.BlockSpec((E_BLOCK, 1), lambda i: (i, 0)),                    # dst (block-local)
            pl.BlockSpec((num_layer, d, E_BLOCK), lambda i: (0, 0, i)),      # bond embeddings
            pl.BlockSpec((num_layer, 2 * d, 4 * d), lambda i: (0, 0, 0)),    # packed param slab
        ],
        out_specs=pl.BlockSpec((d, N_BLOCK), lambda i: (0, i)),
    )
    return pl.pallas_call(
        kernel,
        out_shape=jax.ShapeDtypeStruct((d, total_n), jnp.float32),
        grid_spec=grid_spec,
        compiler_params=pltpu.CompilerParams(dimension_semantics=("parallel",)),
        cost_estimate=pl.CostEstimate(flops=flops, transcendentals=0,
                                      bytes_accessed=bytes_accessed),
    )(xT, src, dst, eembT, wslab)


# ----------------------------- parameters -----------------------------

def init_params(key):
    keys = iter(jax.random.split(key, 64))
    params = {}
    params["atom_tables"] = [
        jax.random.normal(next(keys), (v, EMB_DIM), jnp.float32) * 0.1
        for v in ATOM_FEATURE_DIMS
    ]
    params["bond_tables"] = [
        [jax.random.normal(next(keys), (v, EMB_DIM), jnp.float32) * 0.1
         for v in BOND_FEATURE_DIMS]
        for _ in range(NUM_LAYER)
    ]
    layers = []
    for _ in range(NUM_LAYER):
        p = {}
        p["w1"] = jax.random.normal(next(keys), (EMB_DIM, 2 * EMB_DIM), jnp.float32) * 0.1
        p["b1"] = jax.random.normal(next(keys), (1, 2 * EMB_DIM), jnp.float32) * 0.1
        p["g1"] = 1.0 + jax.random.normal(next(keys), (1, 2 * EMB_DIM), jnp.float32) * 0.1
        p["be1"] = jax.random.normal(next(keys), (1, 2 * EMB_DIM), jnp.float32) * 0.1
        p["m1"] = jax.random.normal(next(keys), (1, 2 * EMB_DIM), jnp.float32) * 0.1
        p["v1"] = 1.0 + jnp.abs(jax.random.normal(next(keys), (1, 2 * EMB_DIM), jnp.float32)) * 0.1
        p["w2"] = jax.random.normal(next(keys), (2 * EMB_DIM, EMB_DIM), jnp.float32) * 0.1
        p["b2"] = jax.random.normal(next(keys), (1, EMB_DIM), jnp.float32) * 0.1
        p["g2"] = 1.0 + jax.random.normal(next(keys), (1, EMB_DIM), jnp.float32) * 0.1
        p["be2"] = jax.random.normal(next(keys), (1, EMB_DIM), jnp.float32) * 0.1
        p["m2"] = jax.random.normal(next(keys), (1, EMB_DIM), jnp.float32) * 0.1
        p["v2"] = 1.0 + jnp.abs(jax.random.normal(next(keys), (1, EMB_DIM), jnp.float32)) * 0.1
        p["eps"] = jnp.zeros((1, 1), jnp.float32)  # GIN eps initialized to 0
        layers.append(p)
    params["layers"] = layers
    return params


def fold_params(params):
    """Fold eval-mode BatchNorms into the adjacent Linears, transpose for the [D, N] kernel
    layout, and pack everything into one [L, 2D, 4D] slab (single parameter DMA).

      BN(z @ w + b) == z @ (w*s) + ((b - m)*s + beta),  s = gamma * rsqrt(var + eps)

    Slab column layout (D = EMB_DIM):
      cols [0,   D)   rows [0, 2D): W1t  (BN1 folded, transposed)   [2D, D]
      col   D         rows [0, 2D): b1t                             [2D, 1]
      col   D+1       rows [0,  D): 1 + eps (broadcast column)      [ D, 1]
      col   D+2       rows [0,  D): b2t                             [ D, 1]
      cols [2D, 4D)   rows [0,  D): W2t  (outer BN folded)          [ D, 2D]
    """
    D = EMB_DIM
    slab = jnp.zeros((NUM_LAYER, 2 * D, 4 * D), jnp.float32)
    for l, p in enumerate(params["layers"]):
        s1 = p["g1"] * jax.lax.rsqrt(p["v1"] + BN_EPS)               # [1, 2D]
        w1t = (p["w1"] * s1).T                                        # [2D, D]
        b1t = ((p["b1"] - p["m1"]) * s1 + p["be1"]).T                 # [2D, 1]
        s2 = p["g2"] * jax.lax.rsqrt(p["v2"] + BN_EPS)               # [1, D]
        w2t = (p["w2"] * s2).T                                        # [D, 2D]
        b2t = ((p["b2"] - p["m2"]) * s2 + p["be2"]).T                 # [D, 1]
        ope = (1.0 + p["eps"][0, 0]) * jnp.ones((D, 1), jnp.float32)  # [D, 1]
        slab = slab.at[l, 0:2 * D, 0:D].set(w1t)
        slab = slab.at[l, 0:2 * D, D:D + 1].set(b1t)
        slab = slab.at[l, 0:D, D + 1:D + 2].set(ope)
        slab = slab.at[l, 0:D, D + 2:D + 3].set(b2t)
        slab = slab.at[l, 0:D, 2 * D:4 * D].set(w2t)
    return slab


# ----------------------------- forward passes -----------------------------

def encode(tables, idx):
    # sum of per-column embedding lookups (AtomEncoder / BondEncoder)
    return sum(tab[idx[:, i]] for i, tab in enumerate(tables))


@jax.jit
def gnn_forward(node_feats, edge_index, edge_attr, atom_tables, bond_tables, wslab):
    # Whole forward (encoders + index prep + fused, batched Pallas kernel) runs under jit.
    x = encode(atom_tables, node_feats)                                  # [TOTAL_N, D]
    xT = x.T                                                             # [D, TOTAL_N]
    # Graph blocks are contiguous, so block-local node ids are just global % N_BLOCK.
    src_local = (edge_index[0] % N_BLOCK).astype(jnp.int32).reshape(1, TOTAL_E)
    dst_local = (edge_index[1] % N_BLOCK).astype(jnp.int32).reshape(TOTAL_E, 1)
    eembT = jnp.stack([encode(bond_tables[l], edge_attr).T
                       for l in range(NUM_LAYER)], axis=0)               # [L, D, TOTAL_E]
    outT = gnn_pallas(xT, src_local, dst_local, eembT, wslab)            # [D, TOTAL_N]
    return outT.T                                                        # JK == 'last'


def gnn_forward_ref(node_feats, edge_index, edge_attr, params):
    # pure-JAX reference mirroring the PyTorch semantics (unfolded BN), for validation
    x = encode(params["atom_tables"], node_feats)
    src, dst = edge_index[0], edge_index[1]
    h = x
    for layer in range(NUM_LAYER):
        p = params["layers"][layer]
        eemb = encode(params["bond_tables"][layer], edge_attr)
        msg = jnp.maximum(h[src] + eemb, 0.0)
        agg = jnp.zeros_like(h).at[dst].add(msg)
        z = (1.0 + p["eps"][0, 0]) * h + agg
        h1 = z @ p["w1"] + p["b1"]
        h1 = (h1 - p["m1"]) * jax.lax.rsqrt(p["v1"] + BN_EPS) * p["g1"] + p["be1"]
        h1 = jnp.maximum(h1, 0.0)
        h2 = h1 @ p["w2"] + p["b2"]
        h2 = (h2 - p["m2"]) * jax.lax.rsqrt(p["v2"] + BN_EPS) * p["g2"] + p["be2"]
        if layer < NUM_LAYER - 1:
            h2 = jnp.maximum(h2, 0.0)
        h = h2
    return h


# ----------------------------- main -----------------------------

if __name__ == "__main__":
    key = jax.random.PRNGKey(0)
    k_param, k_x, k_ei, k_ea = jax.random.split(key, 4)

    params = init_params(k_param)
    wslab = fold_params(params)   # fold + pack once, outside the per-call path

    # Batched disjoint-union graph: node categorical features [TOTAL_N, 3],
    # edge_index [2, TOTAL_E] (global ids), edge_attr [TOTAL_E, 2].
    node_feats = jnp.stack(
        [jax.random.randint(jax.random.fold_in(k_x, i), (TOTAL_N,), 0, v)
         for i, v in enumerate(ATOM_FEATURE_DIMS)], axis=1).astype(jnp.int32)

    k_src, k_dst = jax.random.split(k_ei)
    src_local = jax.random.randint(k_src, (N_GRAPHS, N_EDGES), 0, N_NODES)
    dst_local = jax.random.randint(k_dst, (N_GRAPHS, N_EDGES), 0, N_NODES)
    offsets = (jnp.arange(N_GRAPHS) * N_NODES)[:, None]
    edge_index = jnp.stack([(src_local + offsets).reshape(-1),
                            (dst_local + offsets).reshape(-1)], axis=0).astype(jnp.int32)
    edge_attr = jnp.stack(
        [jax.random.randint(jax.random.fold_in(k_ea, i), (TOTAL_E,), 0, v)
         for i, v in enumerate(BOND_FEATURE_DIMS)], axis=1).astype(jnp.int32)

    out = gnn_forward(node_feats, edge_index, edge_attr,
                      params["atom_tables"], params["bond_tables"], wslab)
    out = jax.block_until_ready(out)

    ref = gnn_forward_ref(node_feats, edge_index, edge_attr, params)
    ref = jax.block_until_ready(ref)

    assert out.shape == (TOTAL_N, EMB_DIM)
    assert np.allclose(np.asarray(out), np.asarray(ref), atol=1e-4, rtol=1e-4)

    print("KERNEL_OK")
</pallas_src>

<mosaic_0001>
module attributes {stable_mosaic.version = 11 : i64} {
  func.func @gnn_fused_kernel(%arg0: i32, %arg1: memref<32x128xf32, #tpu.memory_space<vmem>>, %arg2: memref<1x256xi32, #tpu.memory_space<vmem>>, %arg3: memref<256x1xi32, #tpu.memory_space<vmem>>, %arg4: memref<2x32x256xf32, #tpu.memory_space<vmem>>, %arg5: memref<2x64x128xf32, #tpu.memory_space<vmem>>, %arg6: memref<32x128xf32, #tpu.memory_space<vmem>>) attributes {dimension_semantics = [#tpu.dimension_semantics<parallel>], iteration_bounds = array<i64: 2>, scalar_prefetch = 0 : i64, scratch_operands = 0 : i64, tpu.core_type = #tpu.core_type<tc>, window_params = [{transform_indices = @transform_0, window_bounds = array<i64: 32, 128>}, {transform_indices = @transform_1, window_bounds = array<i64: 1, 256>}, {transform_indices = @transform_2, window_bounds = array<i64: 256, 1>}, {transform_indices = @transform_3, window_bounds = array<i64: 2, 32, 256>}, {pipeline_mode = #tpu.pipeline_mode<synchronous>, transform_indices = @transform_4, window_bounds = array<i64: 2, 64, 128>}, {transform_indices = @transform_5, window_bounds = array<i64: 32, 128>}]} {
    %0 = tpu.iota {dimensions = array<i32: 0>} : vector<128x256xi32>
    %c0 = arith.constant 0 : index
    %c0_0 = arith.constant 0 : index
    %1 = vector.load %arg2[%c0, %c0_0] : memref<1x256xi32, #tpu.memory_space<vmem>>, vector<1x256xi32>
    %2 = vector.broadcast %1 : vector<1x256xi32> to vector<128x256xi32>
    %3 = arith.cmpi eq, %0, %2 : vector<128x256xi32>
    %4 = arith.extui %3 : vector<128x256xi1> to vector<128x256xi32>
    %5 = arith.sitofp %4 : vector<128x256xi32> to vector<128x256xf32>
    %6 = tpu.iota {dimensions = array<i32: 1>} : vector<256x128xi32>
    %c0_1 = arith.constant 0 : index
    %c0_2 = arith.constant 0 : index
    %7 = vector.load %arg3[%c0_1, %c0_2] : memref<256x1xi32, #tpu.memory_space<vmem>>, vector<256x1xi32>
    %8 = vector.broadcast %7 : vector<256x1xi32> to vector<256x128xi32>
    %9 = arith.cmpi eq, %6, %8 : vector<256x128xi32>
    %10 = arith.extui %9 : vector<256x128xi1> to vector<256x128xi32>
    %11 = arith.sitofp %10 : vector<256x128xi32> to vector<256x128xf32>
    %c0_3 = arith.constant 0 : index
    %c0_4 = arith.constant 0 : index
    %12 = vector.load %arg1[%c0_3, %c0_4] : memref<32x128xf32, #tpu.memory_space<vmem>>, vector<32x128xf32>
    %c0_5 = arith.constant 0 : index
    %c0_6 = arith.constant 0 : index
    %c0_7 = arith.constant 0 : index
    %13 = vector.load %arg5[%c0_5, %c0_6, %c0_7] : memref<2x64x128xf32, #tpu.memory_space<vmem>>, vector<1x64x32xf32>
    %14 = vector.shape_cast %13 : vector<1x64x32xf32> to vector<64x32xf32>
    %c0_8 = arith.constant 0 : index
    %c0_9 = arith.constant 0 : index
    %c32 = arith.constant 32 : index
    %15 = vector.load %arg5[%c0_8, %c0_9, %c32] : memref<2x64x128xf32, #tpu.memory_space<vmem>>, vector<1x64x1xf32>
    %16 = vector.shape_cast %15 : vector<1x64x1xf32> to vector<64x1xf32>
    %c0_10 = arith.constant 0 : index
    %c0_11 = arith.constant 0 : index
    %c33 = arith.constant 33 : index
    %17 = vector.load %arg5[%c0_10, %c0_11, %c33] : memref<2x64x128xf32, #tpu.memory_space<vmem>>, vector<1x32x1xf32>
    %18 = vector.shape_cast %17 : vector<1x32x1xf32> to vector<32x1xf32>
    %c0_12 = arith.constant 0 : index
    %c0_13 = arith.constant 0 : index
    %c34 = arith.constant 34 : index
    %19 = vector.load %arg5[%c0_12, %c0_13, %c34] : memref<2x64x128xf32, #tpu.memory_space<vmem>>, vector<1x32x1xf32>
    %20 = vector.shape_cast %19 : vector<1x32x1xf32> to vector<32x1xf32>
    %c0_14 = arith.constant 0 : index
    %c0_15 = arith.constant 0 : index
    %c64 = arith.constant 64 : index
    %21 = vector.load %arg5[%c0_14, %c0_15, %c64] : memref<2x64x128xf32, #tpu.memory_space<vmem>>, vector<1x32x64xf32>
    %22 = vector.shape_cast %21 : vector<1x32x64xf32> to vector<32x64xf32>
    %cst = arith.constant dense<0.000000e+00> : vector<32x256xf32>
    %23 = tpu.matmul %12, %5, %cst {dimension_numbers = #tpu.dot_dimension_numbers<[1], [0], [0], [1], [0, 0, 1, 1], [], []>} : vector<32x128xf32>, vector<128x256xf32>, vector<32x256xf32> -> vector<32x256xf32>
    %c0_16 = arith.constant 0 : index
    %c0_17 = arith.constant 0 : index
    %c0_18 = arith.constant 0 : index
    %24 = vector.load %arg4[%c0_16, %c0_17, %c0_18] : memref<2x32x256xf32, #tpu.memory_space<vmem>>, vector<1x32x256xf32>
    %25 = vector.shape_cast %24 : vector<1x32x256xf32> to vector<32x256xf32>
    %26 = arith.addf %23, %25 : vector<32x256xf32>
    %cst_19 = arith.constant 0.000000e+00 : f32
    %27 = vector.broadcast %cst_19 : f32 to vector<32x256xf32>
    %28 = arith.maximumf %26, %27 : vector<32x256xf32>
    %cst_20 = arith.constant dense<0.000000e+00> : vector<32x128xf32>
    %29 = tpu.matmul %28, %11, %cst_20 {dimension_numbers = #tpu.dot_dimension_numbers<[1], [0], [0], [1], [0, 0, 1, 1], [], []>} : vector<32x256xf32>, vector<256x128xf32>, vector<32x128xf32> -> vector<32x128xf32>
    %30 = vector.broadcast %18 : vector<32x1xf32> to vector<32x128xf32>
    %31 = arith.mulf %30, %12 : vector<32x128xf32>
    %32 = arith.addf %31, %29 : vector<32x128xf32>
    %cst_21 = arith.constant dense<0.000000e+00> : vector<64x128xf32>
    %33 = tpu.matmul %14, %32, %cst_21 {dimension_numbers = #tpu.dot_dimension_numbers<[1], [0], [0], [1], [0, 0, 1, 1], [], []>} : vector<64x32xf32>, vector<32x128xf32>, vector<64x128xf32> -> vector<64x128xf32>
    %34 = vector.broadcast %16 : vector<64x1xf32> to vector<64x128xf32>
    %35 = arith.addf %33, %34 : vector<64x128xf32>
    %cst_22 = arith.constant 0.000000e+00 : f32
    %36 = vector.broadcast %cst_22 : f32 to vector<64x128xf32>
    %37 = arith.maximumf %35, %36 : vector<64x128xf32>
    %cst_23 = arith.constant dense<0.000000e+00> : vector<32x128xf32>
    %38 = tpu.matmul %22, %37, %cst_23 {dimension_numbers = #tpu.dot_dimension_numbers<[1], [0], [0], [1], [0, 0, 1, 1], [], []>} : vector<32x64xf32>, vector<64x128xf32>, vector<32x128xf32> -> vector<32x128xf32>
    %39 = vector.broadcast %20 : vector<32x1xf32> to vector<32x128xf32>
    %40 = arith.addf %38, %39 : vector<32x128xf32>
    %cst_24 = arith.constant 0.000000e+00 : f32
    %41 = vector.broadcast %cst_24 : f32 to vector<32x128xf32>
    %42 = arith.maximumf %40, %41 : vector<32x128xf32>
    %c1 = arith.constant 1 : index
    %c0_25 = arith.constant 0 : index
    %c0_26 = arith.constant 0 : index
    %43 = vector.load %arg5[%c1, %c0_25, %c0_26] : memref<2x64x128xf32, #tpu.memory_space<vmem>>, vector<1x64x32xf32>
    %44 = vector.shape_cast %43 : vector<1x64x32xf32> to vector<64x32xf32>
    %c1_27 = arith.constant 1 : index
    %c0_28 = arith.constant 0 : index
    %c32_29 = arith.constant 32 : index
    %45 = vector.load %arg5[%c1_27, %c0_28, %c32_29] : memref<2x64x128xf32, #tpu.memory_space<vmem>>, vector<1x64x1xf32>
    %46 = vector.shape_cast %45 : vector<1x64x1xf32> to vector<64x1xf32>
    %c1_30 = arith.constant 1 : index
    %c0_31 = arith.constant 0 : index
    %c33_32 = arith.constant 33 : index
    %47 = vector.load %arg5[%c1_30, %c0_31, %c33_32] : memref<2x64x128xf32, #tpu.memory_space<vmem>>, vector<1x32x1xf32>
    %48 = vector.shape_cast %47 : vector<1x32x1xf32> to vector<32x1xf32>
    %c1_33 = arith.constant 1 : index
    %c0_34 = arith.constant 0 : index
    %c34_35 = arith.constant 34 : index
    %49 = vector.load %arg5[%c1_33, %c0_34, %c34_35] : memref<2x64x128xf32, #tpu.memory_space<vmem>>, vector<1x32x1xf32>
    %50 = vector.shape_cast %49 : vector<1x32x1xf32> to vector<32x1xf32>
    %c1_36 = arith.constant 1 : index
    %c0_37 = arith.constant 0 : index
    %c64_38 = arith.constant 64 : index
    %51 = vector.load %arg5[%c1_36, %c0_37, %c64_38] : memref<2x64x128xf32, #tpu.memory_space<vmem>>, vector<1x32x64xf32>
    %52 = vector.shape_cast %51 : vector<1x32x64xf32> to vector<32x64xf32>
    %cst_39 = arith.constant dense<0.000000e+00> : vector<32x256xf32>
    %53 = tpu.matmul %42, %5, %cst_39 {dimension_numbers = #tpu.dot_dimension_numbers<[1], [0], [0], [1], [0, 0, 1, 1], [], []>} : vector<32x128xf32>, vector<128x256xf32>, vector<32x256xf32> -> vector<32x256xf32>
    %c1_40 = arith.constant 1 : index
    %c0_41 = arith.constant 0 : index
    %c0_42 = arith.constant 0 : index
    %54 = vector.load %arg4[%c1_40, %c0_41, %c0_42] : memref<2x32x256xf32, #tpu.memory_space<vmem>>, vector<1x32x256xf32>
    %55 = vector.shape_cast %54 : vector<1x32x256xf32> to vector<32x256xf32>
    %56 = arith.addf %53, %55 : vector<32x256xf32>
    %cst_43 = arith.constant 0.000000e+00 : f32
    %57 = vector.broadcast %cst_43 : f32 to vector<32x256xf32>
    %58 = arith.maximumf %56, %57 : vector<32x256xf32>
    %cst_44 = arith.constant dense<0.000000e+00> : vector<32x128xf32>
    %59 = tpu.matmul %58, %11, %cst_44 {dimension_numbers = #tpu.dot_dimension_numbers<[1], [0], [0], [1], [0, 0, 1, 1], [], []>} : vector<32x256xf32>, vector<256x128xf32>, vector<32x128xf32> -> vector<32x128xf32>
    %60 = vector.broadcast %48 : vector<32x1xf32> to vector<32x128xf32>
    %61 = arith.mulf %60, %42 : vector<32x128xf32>
    %62 = arith.addf %61, %59 : vector<32x128xf32>
    %cst_45 = arith.constant dense<0.000000e+00> : vector<64x128xf32>
    %63 = tpu.matmul %44, %62, %cst_45 {dimension_numbers = #tpu.dot_dimension_numbers<[1], [0], [0], [1], [0, 0, 1, 1], [], []>} : vector<64x32xf32>, vector<32x128xf32>, vector<64x128xf32> -> vector<64x128xf32>
    %64 = vector.broadcast %46 : vector<64x1xf32> to vector<64x128xf32>
    %65 = arith.addf %63, %64 : vector<64x128xf32>
    %cst_46 = arith.constant 0.000000e+00 : f32
    %66 = vector.broadcast %cst_46 : f32 to vector<64x128xf32>
    %67 = arith.maximumf %65, %66 : vector<64x128xf32>
    %cst_47 = arith.constant dense<0.000000e+00> : vector<32x128xf32>
    %68 = tpu.matmul %52, %67, %cst_47 {dimension_numbers = #tpu.dot_dimension_numbers<[1], [0], [0], [1], [0, 0, 1, 1], [], []>} : vector<32x64xf32>, vector<64x128xf32>, vector<32x128xf32> -> vector<32x128xf32>
    %69 = vector.broadcast %50 : vector<32x1xf32> to vector<32x128xf32>
    %70 = arith.addf %68, %69 : vector<32x128xf32>
    %c0_48 = arith.constant 0 : index
    %c0_49 = arith.constant 0 : index
    %71 = vector.load %arg6[%c0_48, %c0_49] : memref<32x128xf32, #tpu.memory_space<vmem>>, vector<32x128xf32>
    tpu.vector_store %arg6[%c0_48, %c0_49], %70 {strides = array<i32>} : memref<32x128xf32, #tpu.memory_space<vmem>>, vector<32x128xf32>,
    return
  }
  func.func @transform_0(%arg0: i32) -> (i32, i32) {
    %c0_i32 = arith.constant 0 : i32
    %c0_i32_0 = arith.constant 0 : i32
    return %c0_i32, %arg0 : i32, i32
  }
  func.func @transform_1(%arg0: i32) -> (i32, i32) {
    %c0_i32 = arith.constant 0 : i32
    %c0_i32_0 = arith.constant 0 : i32
    return %c0_i32, %arg0 : i32, i32
  }
  func.func @transform_2(%arg0: i32) -> (i32, i32) {
    %c0_i32 = arith.constant 0 : i32
    %c0_i32_0 = arith.constant 0 : i32
    return %arg0, %c0_i32 : i32, i32
  }
  func.func @transform_3(%arg0: i32) -> (i32, i32, i32) {
    %c0_i32 = arith.constant 0 : i32
    %c0_i32_0 = arith.constant 0 : i32
    %c0_i32_1 = arith.constant 0 : i32
    return %c0_i32, %c0_i32_0, %arg0 : i32, i32, i32
  }
  func.func @transform_4(%arg0: i32) -> (i32, i32, i32) {
    %c0_i32 = arith.constant 0 : i32
    %c0_i32_0 = arith.constant 0 : i32
    %c0_i32_1 = arith.constant 0 : i32
    %c0_i32_2 = arith.constant 0 : i32
    return %c0_i32, %c0_i32_0, %c0_i32_1 : i32, i32, i32
  }
  func.func @transform_5(%arg0: i32) -> (i32, i32) {
    %c0_i32 = arith.constant 0 : i32
    %c0_i32_0 = arith.constant 0 : i32
    return %c0_i32, %arg0 : i32, i32
  }
}

</mosaic_0001>

<llo_original>
// kernel: gnn_forward.1
$region0: #{gnn_forward.1}
  #allocation0 [shape = 'u32[]', space=smem, size = 0x4, offset = 0x4, fixed_abs, tag = 'smem constant byte address 0x4 - core index']
  #allocation1 [shape = 'u32[144,128]{1,0:T(1,128)}', space=vmem, size = 0x12000, scoped, tag = 'internal scratch']
  %s0 = inlined_call_operand.vmem [shape: f32[32,256], index: 0, kind: input, shape index: {}]
  %s1 = inlined_call_operand.vmem [shape: s32[1,512], index: 1, kind: input, shape index: {}]
  %s2 = inlined_call_operand.vmem [shape: s32[512,1], index: 2, kind: input, shape index: {}]
  %s3 = inlined_call_operand.vmem [shape: f32[2,32,512], index: 3, kind: input, shape index: {}]
  %s4 = inlined_call_operand.vmem [shape: f32[2,64,128], index: 4, kind: input, shape index: {}]
  %s5 = inlined_call_operand.hbm [shape: f32[32,256], index: 5, kind: output, shape index: {}]
  %s6 = sld [smem:[#allocation0]]
  $region114: #{gnn_forward.1} parent=0
    _
  %s8 = ssub.s32 1, %s6
  %s9 = scalar_select 0, %s8, %s6
  $region1: #{gnn_forward.1} parent=0
    #allocation2 [shape = 'u8[32768]{0}', space=vmem, size = 0x8000, scoped, tag = 'input window, operand 0']
    #allocation3 [shape = 'u8[131072]{0}', space=vmem, size = 0x20000, scoped, tag = 'input window, operand 3']
    #allocation4 [shape = 'u8[32768]{0}', space=vmem, size = 0x8000, scoped, tag = 'output window, operand 0']
    #allocation5 [shape = 's32[2]{0}', space=sflag, size = 0x8, scoped, tag = 'scoped memory for gnn_forward.1']
    %10 = vsyncpa [#allocation5], 0
    %s11 = scalar_lea.sflag [#allocation5], 1
    %12 = vsyncpa %s11, 0
    loop: start=0, step=1, limit=4
    $region2: #{gnn_forward.1} parent=1 // loop_pre_header
      _
    $region3: #{gnn_forward.1} parent=1 // loop_header
      %s14 = sphi 0, %s18
      %p15 = scmp.ge.s32.totalorder %s14, 4
      %s24 = sphi 0, %s26
      %s27 = sphi 0, %s24
      %s28 = sphi 0, %s27
      %s44 = sphi 0, %s28
      %s50 = sphi 0, %s52
      %s53 = sphi 0, %s50
      %s54 = sphi 0, %s53
      %s70 = sphi 0, %s54
      %s76 = sphi 0, %s78
      %s79 = sphi 0, %s76
      %s80 = sphi 0, %s79
      %s96 = sphi 0, %s80
      %s102 = sphi 0, %s104
      %s105 = sphi 0, %s102
      %s106 = sphi 0, %s105
      %s122 = sphi 0, %s106
      %s126 = sphi 0, %s126
      %s128 = sphi 0, %s126
      %s129 = sphi 0, %s128
      %s143 = sphi 0, %s129
      %s149 = sphi 0, %s151
      %s152 = sphi 0, %s149
      %s153 = sphi 0, %s152
      %s169 = sphi 0, %s153
    $region4: #{gnn_forward.1} parent=1 // loop_header_branch
      %17 = sbr.rel (%p15) target = $region8
    $region5: #{gnn_forward.1} parent=1 // loop_body
      %s19 = ssub.s32 %s14, 1
      %s20 = ssub.s32 %s14, 2
      %s21 = sadd.s32 %s14, 1
      %s22 = ssub.s32 %s14, %s21
      %p23 = scmp.eq.s32.totalorder %s22, 0
      %s25 = sadd.s32 %s24, 1
      %s26 = scalar_select %p23, %s24, %s25
      %p29 = pneg %p23
      %p30 = scmp.eq.s32.totalorder %s14, 1
      %p31 = por %p29, %p30
      %p32 = scmp.ne.s32.totalorder %s24, %s27
      %p33 = scmp.eq.s32.totalorder %s14, 0
      %p34 = por %p32, %p33
      %p35 = scmp.ne.s32.totalorder %s24, %s27
      %p36 = scmp.eq.s32.totalorder %s19, 1
      %p37 = por %p35, %p36
      %p38 = scmp.ne.s32.totalorder %s27, %s28
      %p39 = scmp.eq.s32.totalorder %s19, 0
      %p40 = por %p38, %p39
      %p41 = scmp.ne.s32.totalorder %s27, %s28
      %p42 = scmp.eq.s32.totalorder %s20, 1
      %p43 = por %p41, %p42
      %p45 = scmp.ne.s32.totalorder %s28, %s44
      %p46 = scmp.eq.s32.totalorder %s20, 0
      %p47 = por %p45, %p46
      %s48 = ssub.s32 %s14, %s21
      %p49 = scmp.eq.s32.totalorder %s48, 0
      %s51 = sadd.s32 %s50, 1
      %s52 = scalar_select %p49, %s50, %s51
      %p55 = pneg %p49
      %p56 = scmp.eq.s32.totalorder %s14, 1
      %p57 = por %p55, %p56
      %p58 = scmp.ne.s32.totalorder %s50, %s53
      %p59 = scmp.eq.s32.totalorder %s14, 0
      %p60 = por %p58, %p59
      %p61 = scmp.ne.s32.totalorder %s50, %s53
      %p62 = scmp.eq.s32.totalorder %s19, 1
      %p63 = por %p61, %p62
      %p64 = scmp.ne.s32.totalorder %s53, %s54
      %p65 = scmp.eq.s32.totalorder %s19, 0
      %p66 = por %p64, %p65
      %p67 = scmp.ne.s32.totalorder %s53, %s54
      %p68 = scmp.eq.s32.totalorder %s20, 1
      %p69 = por %p67, %p68
      %p71 = scmp.ne.s32.totalorder %s54, %s70
      %p72 = scmp.eq.s32.totalorder %s20, 0
      %p73 = por %p71, %p72
      %s74 = ssub.s32 %s14, %s21
      %p75 = scmp.eq.s32.totalorder %s74, 0
      %s77 = sadd.s32 %s76, 1
      %s78 = scalar_select %p75, %s76, %s77
      %p81 = pneg %p75
      %p82 = scmp.eq.s32.totalorder %s14, 1
      %p83 = por %p81, %p82
      %p84 = scmp.ne.s32.totalorder %s76, %s79
      %p85 = scmp.eq.s32.totalorder %s14, 0
      %p86 = por %p84, %p85
      %p87 = scmp.ne.s32.totalorder %s76, %s79
      %p88 = scmp.eq.s32.totalorder %s19, 1
      %p89 = por %p87, %p88
      %p90 = scmp.ne.s32.totalorder %s79, %s80
      %p91 = scmp.eq.s32.totalorder %s19, 0
      %p92 = por %p90, %p91
      %p93 = scmp.ne.s32.totalorder %s79, %s80
      %p94 = scmp.eq.s32.totalorder %s20, 1
      %p95 = por %p93, %p94
      %p97 = scmp.ne.s32.totalorder %s80, %s96
      %p98 = scmp.eq.s32.totalorder %s20, 0
      %p99 = por %p97, %p98
      %s100 = ssub.s32 %s14, %s21
      %p101 = scmp.eq.s32.totalorder %s100, 0
      %s103 = sadd.s32 %s102, 1
      %s104 = scalar_select %p101, %s102, %s103
      %p107 = pneg %p101
      %p108 = scmp.eq.s32.totalorder %s14, 1
      %p109 = por %p107, %p108
      %p110 = scmp.ne.s32.totalorder %s102, %s105
      %p111 = scmp.eq.s32.totalorder %s14, 0
      %p112 = por %p110, %p111
      %p113 = scmp.ne.s32.totalorder %s102, %s105
      %p114 = scmp.eq.s32.totalorder %s19, 1
      %p115 = por %p113, %p114
      %p116 = scmp.ne.s32.totalorder %s105, %s106
      %p117 = scmp.eq.s32.totalorder %s19, 0
      %p118 = por %p116, %p117
      %p119 = scmp.ne.s32.totalorder %s105, %s106
      %p120 = scmp.eq.s32.totalorder %s20, 1
      %p121 = por %p119, %p120
      %p123 = scmp.ne.s32.totalorder %s106, %s122
      %p124 = scmp.eq.s32.totalorder %s20, 0
      %p125 = por %p123, %p124
      %s127 = sadd.s32 %s126, 1
      %p130 = scmp.eq.s32.totalorder %s14, 1
      %p131 = scmp.ne.s32.totalorder %s126, %s128
      %p132 = scmp.eq.s32.totalorder %s14, 0
      %p133 = por %p131, %p132
      %p134 = scmp.ne.s32.totalorder %s126, %s128
      %p135 = scmp.eq.s32.totalorder %s19, 1
      %p136 = por %p134, %p135
      %p137 = scmp.ne.s32.totalorder %s128, %s129
      %p138 = scmp.eq.s32.totalorder %s19, 0
      %p139 = por %p137, %p138
      %p140 = scmp.ne.s32.totalorder %s128, %s129
      %p141 = scmp.eq.s32.totalorder %s20, 1
      %p142 = por %p140, %p141
      %p144 = scmp.ne.s32.totalorder %s129, %s143
      %p145 = scmp.eq.s32.totalorder %s20, 0
      %p146 = por %p144, %p145
      %s147 = ssub.s32 %s14, %s21
      %p148 = scmp.eq.s32.totalorder %s147, 0
      %s150 = sadd.s32 %s149, 1
      %s151 = scalar_select %p148, %s149, %s150
      %p154 = pneg %p148
      %p155 = scmp.eq.s32.totalorder %s14, 1
      %p156 = por %p154, %p155
      %p157 = scmp.ne.s32.totalorder %s149, %s152
      %p158 = scmp.eq.s32.totalorder %s14, 0
      %p159 = por %p157, %p158
      %p160 = scmp.ne.s32.totalorder %s149, %s152
      %p161 = scmp.eq.s32.totalorder %s19, 1
      %p162 = por %p160, %p161
      %p163 = scmp.ne.s32.totalorder %s152, %s153
      %p164 = scmp.eq.s32.totalorder %s19, 0
      %p165 = por %p163, %p164
      %p166 = scmp.ne.s32.totalorder %s152, %s153
      %p167 = scmp.eq.s32.totalorder %s20, 1
      %p168 = por %p166, %p167
      %p170 = scmp.ne.s32.totalorder %s153, %s169
      %p171 = scmp.eq.s32.totalorder %s20, 0
      %p172 = por %p170, %p171
      %p173 = scmp.le.s32.totalorder 1, %s14
      %p174 = scmp.lt.s32.totalorder %s14, 3
      %p175 = pnand %p173, %p174
      %p176 = pneg %p175
      // Predicated region
      $region9: #{gnn_forward.1} parent=5 // pred_check
        _
      $region10: #{gnn_forward.1} parent=5 // pred_check_branch
        %178 = sbr.rel (%p175) target = $region12
      $region11: #{gnn_forward.1} parent=5 // pred_region
        %s179 = ssub.s32 %s14, 1
        // Predicated region
        $region13: #{gnn_forward.1} parent=11 // pred_check
          %p180 = pneg %p139
        $region14: #{gnn_forward.1} parent=11 // pred_check_branch
          %182 = sbr.rel (%p180) target = $region16
        $region15: #{gnn_forward.1} parent=11 // pred_region
          _
        $region16: #{gnn_forward.1} parent=11 // pred_fallthru
          _
      $region12: #{gnn_forward.1} parent=5 // pred_fallthru
        _
      %p183 = scmp.lt.s32.totalorder %s14, 2
      // Predicated region
      $region17: #{gnn_forward.1} parent=5 // pred_check
        %p184 = pneg %p183
      $region18: #{gnn_forward.1} parent=5 // pred_check_branch
        %186 = sbr.rel (%p184) target = $region20
      $region19: #{gnn_forward.1} parent=5 // pred_region
        // Predicated region
        $region21: #{gnn_forward.1} parent=19 // pred_check
          %p187 = pneg %p34
        $region22: #{gnn_forward.1} parent=19 // pred_check_branch
          %189 = sbr.rel (%p187) target = $region24
        $region23: #{gnn_forward.1} parent=19 // pred_region
          %s190 = sand.u32 %s24, 1
          %s191 = sand.u32 %s24, 1
          %s192 = smul.addr %s191, 32
          %s193 = scalar_lea.vmem [#allocation2], %s192
          %s194 = smul.addr %s14, 8
          %s195 = scalar_lea.vmem %s0, %s194
          // Predicated region
          $region25: #{gnn_forward.1} parent=23 // pred_check
            _
          $region26: #{gnn_forward.1} parent=23 // pred_check_branch
            %197 = sbr.rel (0) target = $region28
          $region27: #{gnn_forward.1} parent=23 // pred_region
            // Predicated region
            $region29: #{gnn_forward.1} parent=27 // pred_check
              _
            $region30: #{gnn_forward.1} parent=27 // pred_check_branch
              %199 = sbr.rel (0) target = $region32
            $region31: #{gnn_forward.1} parent=27 // pred_region
              // Predicated region
              $region44: #{gnn_forward.1} parent=31 // pred_check
                _
              $region45: #{gnn_forward.1} parent=31 // pred_check_branch
                %221 = sbr.rel (0) target = $region47
              $region46: #{gnn_forward.1} parent=31 // pred_region
                loop: start=0, step=1, limit=1
                $region48: #{gnn_forward.1} parent=46 // loop_pre_header
                  _
                $region49: #{gnn_forward.1} parent=46 // loop_header
                  %s223 = sphi 0, %s227
                  %p224 = scmp.ge.s32.totalorder %s223, 1
                  %s228 = sphi %s195, %s195
                  %s229 = sphi %s193, %s193
                $region50: #{gnn_forward.1} parent=46 // loop_header_branch
                  %226 = sbr.rel (%p224) target = $region54
                $region51: #{gnn_forward.1} parent=46 // loop_body
                  %v230 = vld [vmem:[%s228] sm:$0xff]
                  %231 = vst [vmem:[%s229] sm:$0xff] %v230
                  %v232 = vld [vmem:[%s228 + $0x10] sm:$0xff]
                  %233 = vst [vmem:[%s229 + $0x8] sm:$0xff] %v232
                  %v234 = vld [vmem:[%s228 + $0x20] sm:$0xff]
                  %235 = vst [vmem:[%s229 + $0x10] sm:$0xff] %v234
                  %v236 = vld [vmem:[%s228 + $0x30] sm:$0xff]
                  %237 = vst [vmem:[%s229 + $0x18] sm:$0xff] %v236
                $region52: #{gnn_forward.1} parent=46 // loop_footer
                  %s227 = sadd.s32 1, %s223
                $region53: #{gnn_forward.1} parent=46 // loop_footer_branch
                  %222 = sbr.rel target = $region49
                $region54: #{gnn_forward.1} parent=46 // loop_exit
                  _
              $region47: #{gnn_forward.1} parent=31 // pred_fallthru
                _
              // Predicated region
              $region55: #{gnn_forward.1} parent=31 // pred_check
                _
              $region56: #{gnn_forward.1} parent=31 // pred_check_branch
                %239 = sbr.rel target = $region58
              $region57: #{gnn_forward.1} parent=31 // pred_region
                _
              $region58: #{gnn_forward.1} parent=31 // pred_fallthru
                _
            $region32: #{gnn_forward.1} parent=27 // pred_fallthru
              _
            // Predicated region
            $region33: #{gnn_forward.1} parent=27 // pred_check
              _
            $region34: #{gnn_forward.1} parent=27 // pred_check_branch
              %201 = sbr.rel target = $region36
            $region35: #{gnn_forward.1} parent=27 // pred_region
              %s203 = ssub.s32 256, 1
              loop: start=0, step=1, limit=1
              $region37: #{gnn_forward.1} parent=35 // loop_pre_header
                _
              $region38: #{gnn_forward.1} parent=35 // loop_header
                %s205 = sphi 0, %s209
                %p206 = scmp.ge.s32.totalorder %s205, 1
                %s210 = sphi %s195, %s195
                %s211 = sphi %s193, %s193
              $region39: #{gnn_forward.1} parent=35 // loop_header_branch
                %208 = sbr.rel (%p206) target = $region43
              $region40: #{gnn_forward.1} parent=35 // loop_body
                %v212 = vld [vmem:[%s210] sm:%s203]
                %213 = vst [vmem:[%s211] sm:%s203] %v212
                %v214 = vld [vmem:[%s210 + $0x10] sm:%s203]
                %215 = vst [vmem:[%s211 + $0x8] sm:%s203] %v214
                %v216 = vld [vmem:[%s210 + $0x20] sm:%s203]
                %217 = vst [vmem:[%s211 + $0x10] sm:%s203] %v216
                %v218 = vld [vmem:[%s210 + $0x30] sm:%s203]
                %219 = vst [vmem:[%s211 + $0x18] sm:%s203] %v218
              $region41: #{gnn_forward.1} parent=35 // loop_footer
                %s209 = sadd.s32 1, %s205
              $region42: #{gnn_forward.1} parent=35 // loop_footer_branch
                %204 = sbr.rel target = $region38
              $region43: #{gnn_forward.1} parent=35 // loop_exit
                _
            $region36: #{gnn_forward.1} parent=27 // pred_fallthru
              _
          $region28: #{gnn_forward.1} parent=23 // pred_fallthru
            _
          %240 = vnop
        $region24: #{gnn_forward.1} parent=19 // pred_fallthru
          _
        // Predicated region
        $region59: #{gnn_forward.1} parent=19 // pred_check
          %p241 = pneg %p60
        $region60: #{gnn_forward.1} parent=19 // pred_check_branch
          %243 = sbr.rel (%p241) target = $region62
        $region61: #{gnn_forward.1} parent=19 // pred_region
          %s244 = smul.u32 2, %s14
          %p245 = scmp.lt.s32.totalorder %s244, 3
          %s246 = scalar_select %p245, %s244, 3
          %s247 = scalar_lea.vmem %s1, %s246
          %s248 = smul.u32 2, %s14
        $region62: #{gnn_forward.1} parent=19 // pred_fallthru
          _
        // Predicated region
        $region63: #{gnn_forward.1} parent=19 // pred_check
          %p249 = pneg %p86
        $region64: #{gnn_forward.1} parent=19 // pred_check_branch
          %251 = sbr.rel (%p249) target = $region66
        $region65: #{gnn_forward.1} parent=19 // pred_region
          %s252 = smul.u32 32, %s14
          %p253 = scmp.lt.s32.totalorder %s252, 63
          %s254 = scalar_select %p253, %s252, 63
          %s255 = smul.addr %s254, 8
          %s256 = scalar_lea.vmem %s2, %s255
          %s257 = smul.u32 32, %s14
        $region66: #{gnn_forward.1} parent=19 // pred_fallthru
          _
        // Predicated region
        $region67: #{gnn_forward.1} parent=19 // pred_check
          %p258 = pneg %p112
        $region68: #{gnn_forward.1} parent=19 // pred_check_branch
          %260 = sbr.rel (%p258) target = $region70
        $region69: #{gnn_forward.1} parent=19 // pred_region
          %s261 = sand.u32 %s102, 1
          %s262 = sand.u32 %s102, 1
          %s263 = smul.addr %s262, 128
          %s264 = scalar_lea.vmem [#allocation3], %s263
          %s265 = smul.u32 2, %s14
          %s266 = smul.addr %s265, 8
          %s267 = scalar_lea.vmem %s3, %s266
          // Predicated region
          $region71: #{gnn_forward.1} parent=69 // pred_check
            _
          $region72: #{gnn_forward.1} parent=69 // pred_check_branch
            %269 = sbr.rel (0) target = $region74
          $region73: #{gnn_forward.1} parent=69 // pred_region
            // Predicated region
            $region75: #{gnn_forward.1} parent=73 // pred_check
              _
            $region76: #{gnn_forward.1} parent=73 // pred_check_branch
              %271 = sbr.rel (0) target = $region78
            $region77: #{gnn_forward.1} parent=73 // pred_region
              loop: start=0, step=1, limit=1
              $region79: #{gnn_forward.1} parent=77 // loop_pre_header
                _
              $region80: #{gnn_forward.1} parent=77 // loop_header
                %s273 = sphi 0, %s277
                %p274 = scmp.ge.s32.totalorder %s273, 1
                %s278 = sphi %s267, %s267
                %s279 = sphi %s264, %s264
              $region81: #{gnn_forward.1} parent=77 // loop_header_branch
                %276 = sbr.rel (%p274) target = $region85
              $region82: #{gnn_forward.1} parent=77 // loop_body
                %v280 = vld [vmem:[%s278] sm:$0xff]
                %281 = vst [vmem:[%s279] sm:$0xff] %v280
                %v282 = vld [vmem:[%s278 + $0x8] sm:$0xff]
                %283 = vst [vmem:[%s279 + $0x8] sm:$0xff] %v282
                %v284 = vld [vmem:[%s278 + $0x20] sm:$0xff]
                %285 = vst [vmem:[%s279 + $0x10] sm:$0xff] %v284
                %v286 = vld [vmem:[%s278 + $0x28] sm:$0xff]
                %287 = vst [vmem:[%s279 + $0x18] sm:$0xff] %v286
                %v288 = vld [vmem:[%s278 + $0x40] sm:$0xff]
                %289 = vst [vmem:[%s279 + $0x20] sm:$0xff] %v288
                %v290 = vld [vmem:[%s278 + $0x48] sm:$0xff]
                %291 = vst [vmem:[%s279 + $0x28] sm:$0xff] %v290
                %v292 = vld [vmem:[%s278 + $0x60] sm:$0xff]
                %293 = vst [vmem:[%s279 + $0x30] sm:$0xff] %v292
                %v294 = vld [vmem:[%s278 + $0x68] sm:$0xff]
                %295 = vst [vmem:[%s279 + $0x38] sm:$0xff] %v294
                %v296 = vld [vmem:[%s278 + $0x80] sm:$0xff]
                %297 = vst [vmem:[%s279 + $0x40] sm:$0xff] %v296
                %v298 = vld [vmem:[%s278 + $0x88] sm:$0xff]
                %299 = vst [vmem:[%s279 + $0x48] sm:$0xff] %v298
                %v300 = vld [vmem:[%s278 + $0xa0] sm:$0xff]
                %301 = vst [vmem:[%s279 + $0x50] sm:$0xff] %v300
                %v302 = vld [vmem:[%s278 + $0xa8] sm:$0xff]
                %303 = vst [vmem:[%s279 + $0x58] sm:$0xff] %v302
                %v304 = vld [vmem:[%s278 + $0xc0] sm:$0xff]
                %305 = vst [vmem:[%s279 + $0x60] sm:$0xff] %v304
                %v306 = vld [vmem:[%s278 + $0xc8] sm:$0xff]
                %307 = vst [vmem:[%s279 + $0x68] sm:$0xff] %v306
                %v308 = vld [vmem:[%s278 + $0xe0] sm:$0xff]
                %309 = vst [vmem:[%s279 + $0x70] sm:$0xff] %v308
                %v310 = vld [vmem:[%s278 + $0xe8] sm:$0xff]
                %311 = vst [vmem:[%s279 + $0x78] sm:$0xff] %v310
              $region83: #{gnn_forward.1} parent=77 // loop_footer
                %s277 = sadd.s32 1, %s273
              $region84: #{gnn_forward.1} parent=77 // loop_footer_branch
                %272 = sbr.rel target = $region80
              $region85: #{gnn_forward.1} parent=77 // loop_exit
                _
            $region78: #{gnn_forward.1} parent=73 // pred_fallthru
              _
            // Predicated region
            $region86: #{gnn_forward.1} parent=73 // pred_check
              _
            $region87: #{gnn_forward.1} parent=73 // pred_check_branch
              %313 = sbr.rel target = $region89
            $region88: #{gnn_forward.1} parent=73 // pred_region
              _
            $region89: #{gnn_forward.1} parent=73 // pred_fallthru
              _
          $region74: #{gnn_forward.1} parent=69 // pred_fallthru
            _
          %314 = vnop
        $region70: #{gnn_forward.1} parent=19 // pred_fallthru
          _
      $region20: #{gnn_forward.1} parent=5 // pred_fallthru
        _
      %p315 = scmp.le.s32.totalorder 1, %s14
      %p316 = scmp.lt.s32.totalorder %s14, 3
      %p317 = pnand %p315, %p316
      %p318 = pneg %p317
      // Predicated region
      $region90: #{gnn_forward.1} parent=5 // pred_check
        _
      $region91: #{gnn_forward.1} parent=5 // pred_check_branch
        %320 = sbr.rel (%p317) target = $region93
      $region92: #{gnn_forward.1} parent=5 // pred_region
        %s321 = ssub.s32 %s14, 1
        %s322 = sand.u32 %s27, 1
        %s323 = sand.u32 %s27, 1
        %s324 = smul.addr %s323, 32
        %s325 = scalar_lea.vmem [#allocation2], %s324
        // Predicated region
        $region94: #{gnn_forward.1} parent=92 // pred_check
          %p326 = pneg %p40
        $region95: #{gnn_forward.1} parent=92 // pred_check_branch
          %328 = sbr.rel (%p326) target = $region97
        $region96: #{gnn_forward.1} parent=92 // pred_region
          _
        $region97: #{gnn_forward.1} parent=92 // pred_fallthru
          _
        %s329 = sand.u32 %s105, 1
        %s330 = sand.u32 %s105, 1
        %s331 = smul.addr %s330, 128
        %s332 = scalar_lea.vmem [#allocation3], %s331
        // Predicated region
        $region98: #{gnn_forward.1} parent=92 // pred_check
          %p333 = pneg %p118
        $region99: #{gnn_forward.1} parent=92 // pred_check_branch
          %335 = sbr.rel (%p333) target = $region101
        $region100: #{gnn_forward.1} parent=92 // pred_region
          _
        $region101: #{gnn_forward.1} parent=92 // pred_fallthru
          _
        %s336 = sand.u32 %s27, 1
        %s337 = sand.u32 %s27, 1
        %s338 = smul.addr %s337, 32
        %s339 = scalar_lea.vmem [#allocation2], %s338
        %p340 = pneg %p40
        %p341 = pneg %p37
        %s342 = smul.u32 2, %s19
        %p343 = scmp.lt.s32.totalorder %s342, 3
        %s344 = scalar_select %p343, %s342, 3
        %s345 = scalar_lea.vmem %s1, %s344
        %p346 = pneg %p66
        %p347 = pneg %p63
        %s348 = smul.u32 32, %s19
        %p349 = scmp.lt.s32.totalorder %s348, 63
        %s350 = scalar_select %p349, %s348, 63
        %s351 = smul.addr %s350, 8
        %s352 = scalar_lea.vmem %s2, %s351
        %p353 = pneg %p92
        %p354 = pneg %p89
        %s355 = sand.u32 %s105, 1
        %s356 = sand.u32 %s105, 1
        %s357 = smul.addr %s356, 128
        %s358 = scalar_lea.vmem [#allocation3], %s357
        %p359 = pneg %p118
        %p360 = pneg %p115
        %p361 = pneg %p139
        %p362 = pneg %p136
        %p363 = pneg %p165
        %p364 = pneg %p162
        %s365 = sand.u32 %s152, 1
        %s366 = scalar_lea.sflag [#allocation5], %s365
        %s367 = sand.u32 %s152, 1
        %s368 = smul.addr %s367, 32
        %s369 = scalar_lea.vmem [#allocation4], %s368
        %s370 = smul.u32 2, %s19
        %p371 = scmp.lt.s32.totalorder %s370, 3
        %s372 = scalar_select %p371, %s370, 3
        %s373 = scalar_lea.vmem %s1, %s372
        %s374 = smul.u32 2, %s19
        %s375 = smul.u32 32, %s19
        %p376 = scmp.lt.s32.totalorder %s375, 63
        %s377 = scalar_select %p376, %s375, 63
        %s378 = smul.addr %s377, 8
        %s379 = scalar_lea.vmem %s2, %s378
        %s380 = smul.u32 32, %s19
        %s381 = smul.u32 2, %s19
        %v382 = vlaneseq
        %v383 = vshrl.u32 %v382, 7
        %v384 = vadd.s32 %v383, 8
        %v385 = vadd.s32 %v383, 16
        %v386 = vadd.s32 %v383, 24
        %v387 = vadd.s32 %v383, 32
        %v388 = vadd.s32 %v383, 40
        %v389 = vadd.s32 %v383, 48
        %v390 = vadd.s32 %v383, 56
        %v391 = vadd.s32 %v383, 64
        %v392 = vadd.s32 %v383, 72
        %v393 = vadd.s32 %v383, 80
        %v394 = vadd.s32 %v383, 88
        %v395 = vadd.s32 %v383, 96
        %v396 = vadd.s32 %v383, 104
        %v397 = vadd.s32 %v383, 112
        %v398 = vadd.s32 %v383, 120
        %v399 = vld [vmem:[%s373] sm:$0x3]
        %v400 = vlaneseq
        %v401 = vshrl.u32 %v400, 7
        %v402 = vsub.s32 0, %v401
        %v403 = vrot.slane %v399, %v402
        %v404 = vlaneseq
        %v405 = vshrl.u32 %v404, 7
        %v406 = vsub.s32 1, %v405
        %v407 = vrot.slane %v399, %v406
        %vm408 = vcmp.eq.s32.totalorder %v383, %v403
        %vm409 = vcmp.eq.s32.totalorder %v383, %v407
        %vm410 = vcmp.eq.s32.totalorder %v384, %v403
        %vm411 = vcmp.eq.s32.totalorder %v384, %v407
        %vm412 = vcmp.eq.s32.totalorder %v385, %v403
        %vm413 = vcmp.eq.s32.totalorder %v385, %v407
        %vm414 = vcmp.eq.s32.totalorder %v386, %v403
        %vm415 = vcmp.eq.s32.totalorder %v386, %v407
        %vm416 = vcmp.eq.s32.totalorder %v387, %v403
        %vm417 = vcmp.eq.s32.totalorder %v387, %v407
        %vm418 = vcmp.eq.s32.totalorder %v388, %v403
        %vm419 = vcmp.eq.s32.totalorder %v388, %v407
        %vm420 = vcmp.eq.s32.totalorder %v389, %v403
        %vm421 = vcmp.eq.s32.totalorder %v389, %v407
        %vm422 = vcmp.eq.s32.totalorder %v390, %v403
        %vm423 = vcmp.eq.s32.totalorder %v390, %v407
        %vm424 = vcmp.eq.s32.totalorder %v391, %v403
        %vm425 = vcmp.eq.s32.totalorder %v391, %v407
        %vm426 = vcmp.eq.s32.totalorder %v392, %v403
        %vm427 = vcmp.eq.s32.totalorder %v392, %v407
        %vm428 = vcmp.eq.s32.totalorder %v393, %v403
        %vm429 = vcmp.eq.s32.totalorder %v393, %v407
        %vm430 = vcmp.eq.s32.totalorder %v394, %v403
        %vm431 = vcmp.eq.s32.totalorder %v394, %v407
        %vm432 = vcmp.eq.s32.totalorder %v395, %v403
        %vm433 = vcmp.eq.s32.totalorder %v395, %v407
        %vm434 = vcmp.eq.s32.totalorder %v396, %v403
        %vm435 = vcmp.eq.s32.totalorder %v396, %v407
        %vm436 = vcmp.eq.s32.totalorder %v397, %v403
        %vm437 = vcmp.eq.s32.totalorder %v397, %v407
        %vm438 = vcmp.eq.s32.totalorder %v398, %v403
        %vm439 = vcmp.eq.s32.totalorder %v398, %v407
        %v440 = vsel %vm408, 1, 0
        %v441 = vsel %vm409, 1, 0
        %v442 = vsel %vm410, 1, 0
        %v443 = vsel %vm411, 1, 0
        %v444 = vsel %vm412, 1, 0
        %v445 = vsel %vm413, 1, 0
        %v446 = vsel %vm414, 1, 0
        %v447 = vsel %vm415, 1, 0
        %v448 = vsel %vm416, 1, 0
        %v449 = vsel %vm417, 1, 0
        %v450 = vsel %vm418, 1, 0
        %v451 = vsel %vm419, 1, 0
        %v452 = vsel %vm420, 1, 0
        %v453 = vsel %vm421, 1, 0
        %v454 = vsel %vm422, 1, 0
        %v455 = vsel %vm423, 1, 0
        %v456 = vsel %vm424, 1, 0
        %v457 = vsel %vm425, 1, 0
        %v458 = vsel %vm426, 1, 0
        %v459 = vsel %vm427, 1, 0
        %v460 = vsel %vm428, 1, 0
        %v461 = vsel %vm429, 1, 0
        %v462 = vsel %vm430, 1, 0
        %v463 = vsel %vm431, 1, 0
        %v464 = vsel %vm432, 1, 0
        %v465 = vsel %vm433, 1, 0
        %v466 = vsel %vm434, 1, 0
        %v467 = vsel %vm435, 1, 0
        %v468 = vsel %vm436, 1, 0
        %v469 = vsel %vm437, 1, 0
        %v470 = vsel %vm438, 1, 0
        %v471 = vsel %vm439, 1, 0
        %v472 = vcvt.s32.f32 %v440
        %v473 = vcvt.s32.f32 %v441
        %v474 = vcvt.s32.f32 %v442
        %v475 = vcvt.s32.f32 %v443
        %v476 = vcvt.s32.f32 %v444
        %v477 = vcvt.s32.f32 %v445
        %v478 = vcvt.s32.f32 %v446
        %v479 = vcvt.s32.f32 %v447
        %v480 = vcvt.s32.f32 %v448
        %v481 = vcvt.s32.f32 %v449
        %v482 = vcvt.s32.f32 %v450
        %v483 = vcvt.s32.f32 %v451
        %v484 = vcvt.s32.f32 %v452
        %v485 = vcvt.s32.f32 %v453
        %v486 = vcvt.s32.f32 %v454
        %v487 = vcvt.s32.f32 %v455
        %v488 = vcvt.s32.f32 %v456
        %v489 = vcvt.s32.f32 %v457
        %v490 = vcvt.s32.f32 %v458
        %v491 = vcvt.s32.f32 %v459
        %v492 = vcvt.s32.f32 %v460
        %v493 = vcvt.s32.f32 %v461
        %v494 = vcvt.s32.f32 %v462
        %v495 = vcvt.s32.f32 %v463
        %v496 = vcvt.s32.f32 %v464
        %v497 = vcvt.s32.f32 %v465
        %v498 = vcvt.s32.f32 %v466
        %v499 = vcvt.s32.f32 %v467
        %v500 = vcvt.s32.f32 %v468
        %v501 = vcvt.s32.f32 %v469
        %v502 = vcvt.s32.f32 %v470
        %v503 = vcvt.s32.f32 %v471
        %v504 = vlaneseq
        %v505 = vand.u32 %v504, 127
        %v506 = vld [vmem:[%s379] sm:$0xff]
        %v507 = vld [vmem:[%s379 + $0x8] sm:$0xff]
        %v508 = vld [vmem:[%s379 + $0x10] sm:$0xff]
        %v509 = vld [vmem:[%s379 + $0x18] sm:$0xff]
        %v510 = vld [vmem:[%s379 + $0x20] sm:$0xff]
        %v511 = vld [vmem:[%s379 + $0x28] sm:$0xff]
        %v512 = vld [vmem:[%s379 + $0x30] sm:$0xff]
        %v513 = vld [vmem:[%s379 + $0x38] sm:$0xff]
        %v514 = vld [vmem:[%s379 + $0x40] sm:$0xff]
        %v515 = vld [vmem:[%s379 + $0x48] sm:$0xff]
        %v516 = vld [vmem:[%s379 + $0x50] sm:$0xff]
        %v517 = vld [vmem:[%s379 + $0x58] sm:$0xff]
        %v518 = vld [vmem:[%s379 + $0x60] sm:$0xff]
        %v519 = vld [vmem:[%s379 + $0x68] sm:$0xff]
        %v520 = vld [vmem:[%s379 + $0x70] sm:$0xff]
        %v521 = vld [vmem:[%s379 + $0x78] sm:$0xff]
        %v522 = vld [vmem:[%s379 + $0x80] sm:$0xff]
        %v523 = vld [vmem:[%s379 + $0x88] sm:$0xff]
        %v524 = vld [vmem:[%s379 + $0x90] sm:$0xff]
        %v525 = vld [vmem:[%s379 + $0x98] sm:$0xff]
        %v526 = vld [vmem:[%s379 + $0xa0] sm:$0xff]
        %v527 = vld [vmem:[%s379 + $0xa8] sm:$0xff]
        %v528 = vld [vmem:[%s379 + $0xb0] sm:$0xff]
        %v529 = vld [vmem:[%s379 + $0xb8] sm:$0xff]
        %v530 = vld [vmem:[%s379 + $0xc0] sm:$0xff]
        %v531 = vld [vmem:[%s379 + $0xc8] sm:$0xff]
        %v532 = vld [vmem:[%s379 + $0xd0] sm:$0xff]
        %v533 = vld [vmem:[%s379 + $0xd8] sm:$0xff]
        %v534 = vld [vmem:[%s379 + $0xe0] sm:$0xff]
        %v535 = vld [vmem:[%s379 + $0xe8] sm:$0xff]
        %v536 = vld [vmem:[%s379 + $0xf0] sm:$0xff]
        %v537 = vld [vmem:[%s379 + $0xf8] sm:$0xff]
        %538 = vset.pattern.permute.xlu0 0
        %539 = vperm.xlu0 %538, %v506
        %v540 = vpop.permute.xlu0 %539
        %541 = vset.pattern.permute.xlu0 0
        %542 = vperm.xlu0 %541, %v507
        %v543 = vpop.permute.xlu0 %542
        %544 = vset.pattern.permute.xlu0 0
        %545 = vperm.xlu0 %544, %v508
        %v546 = vpop.permute.xlu0 %545
        %547 = vset.pattern.permute.xlu0 0
        %548 = vperm.xlu0 %547, %v509
        %v549 = vpop.permute.xlu0 %548
        %550 = vset.pattern.permute.xlu0 0
        %551 = vperm.xlu0 %550, %v510
        %v552 = vpop.permute.xlu0 %551
        %553 = vset.pattern.permute.xlu0 0
        %554 = vperm.xlu0 %553, %v511
        %v555 = vpop.permute.xlu0 %554
        %556 = vset.pattern.permute.xlu0 0
        %557 = vperm.xlu0 %556, %v512
        %v558 = vpop.permute.xlu0 %557
        %559 = vset.pattern.permute.xlu0 0
        %560 = vperm.xlu0 %559, %v513
        %v561 = vpop.permute.xlu0 %560
        %562 = vset.pattern.permute.xlu0 0
        %563 = vperm.xlu0 %562, %v514
        %v564 = vpop.permute.xlu0 %563
        %565 = vset.pattern.permute.xlu0 0
        %566 = vperm.xlu0 %565, %v515
        %v567 = vpop.permute.xlu0 %566
        %568 = vset.pattern.permute.xlu0 0
        %569 = vperm.xlu0 %568, %v516
        %v570 = vpop.permute.xlu0 %569
        %571 = vset.pattern.permute.xlu0 0
        %572 = vperm.xlu0 %571, %v517
        %v573 = vpop.permute.xlu0 %572
        %574 = vset.pattern.permute.xlu0 0
        %575 = vperm.xlu0 %574, %v518
        %v576 = vpop.permute.xlu0 %575
        %577 = vset.pattern.permute.xlu0 0
        %578 = vperm.xlu0 %577, %v519
        %v579 = vpop.permute.xlu0 %578
        %580 = vset.pattern.permute.xlu0 0
        %581 = vperm.xlu0 %580, %v520
        %v582 = vpop.permute.xlu0 %581
        %583 = vset.pattern.permute.xlu0 0
        %584 = vperm.xlu0 %583, %v521
        %v585 = vpop.permute.xlu0 %584
        %586 = vset.pattern.permute.xlu0 0
        %587 = vperm.xlu0 %586, %v522
        %v588 = vpop.permute.xlu0 %587
        %589 = vset.pattern.permute.xlu0 0
        %590 = vperm.xlu0 %589, %v523
        %v591 = vpop.permute.xlu0 %590
        %592 = vset.pattern.permute.xlu0 0
        %593 = vperm.xlu0 %592, %v524
        %v594 = vpop.permute.xlu0 %593
        %595 = vset.pattern.permute.xlu0 0
        %596 = vperm.xlu0 %595, %v525
        %v597 = vpop.permute.xlu0 %596
        %598 = vset.pattern.permute.xlu0 0
        %599 = vperm.xlu0 %598, %v526
        %v600 = vpop.permute.xlu0 %599
        %601 = vset.pattern.permute.xlu0 0
        %602 = vperm.xlu0 %601, %v527
        %v603 = vpop.permute.xlu0 %602
        %604 = vset.pattern.permute.xlu0 0
        %605 = vperm.xlu0 %604, %v528
        %v606 = vpop.permute.xlu0 %605
        %607 = vset.pattern.permute.xlu0 0
        %608 = vperm.xlu0 %607, %v529
        %v609 = vpop.permute.xlu0 %608
        %610 = vset.pattern.permute.xlu0 0
        %611 = vperm.xlu0 %610, %v530
        %v612 = vpop.permute.xlu0 %611
        %613 = vset.pattern.permute.xlu0 0
        %614 = vperm.xlu0 %613, %v531
        %v615 = vpop.permute.xlu0 %614
        %616 = vset.pattern.permute.xlu0 0
        %617 = vperm.xlu0 %616, %v532
        %v618 = vpop.permute.xlu0 %617
        %619 = vset.pattern.permute.xlu0 0
        %620 = vperm.xlu0 %619, %v533
        %v621 = vpop.permute.xlu0 %620
        %622 = vset.pattern.permute.xlu0 0
        %623 = vperm.xlu0 %622, %v534
        %v624 = vpop.permute.xlu0 %623
        %625 = vset.pattern.permute.xlu0 0
        %626 = vperm.xlu0 %625, %v535
        %v627 = vpop.permute.xlu0 %626
        %628 = vset.pattern.permute.xlu0 0
        %629 = vperm.xlu0 %628, %v536
        %v630 = vpop.permute.xlu0 %629
        %631 = vset.pattern.permute.xlu0 0
        %632 = vperm.xlu0 %631, %v537
        %v633 = vpop.permute.xlu0 %632
        %vm634 = vcmp.eq.s32.totalorder %v505, %v540
        %vm635 = vcmp.eq.s32.totalorder %v505, %v543
        %vm636 = vcmp.eq.s32.totalorder %v505, %v546
        %vm637 = vcmp.eq.s32.totalorder %v505, %v549
        %vm638 = vcmp.eq.s32.totalorder %v505, %v552
        %vm639 = vcmp.eq.s32.totalorder %v505, %v555
        %vm640 = vcmp.eq.s32.totalorder %v505, %v558
        %vm641 = vcmp.eq.s32.totalorder %v505, %v561
        %vm642 = vcmp.eq.s32.totalorder %v505, %v564
        %vm643 = vcmp.eq.s32.totalorder %v505, %v567
        %vm644 = vcmp.eq.s32.totalorder %v505, %v570
        %vm645 = vcmp.eq.s32.totalorder %v505, %v573
        %vm646 = vcmp.eq.s32.totalorder %v505, %v576
        %vm647 = vcmp.eq.s32.totalorder %v505, %v579
        %vm648 = vcmp.eq.s32.totalorder %v505, %v582
        %vm649 = vcmp.eq.s32.totalorder %v505, %v585
        %vm650 = vcmp.eq.s32.totalorder %v505, %v588
        %vm651 = vcmp.eq.s32.totalorder %v505, %v591
        %vm652 = vcmp.eq.s32.totalorder %v505, %v594
        %vm653 = vcmp.eq.s32.totalorder %v505, %v597
        %vm654 = vcmp.eq.s32.totalorder %v505, %v600
        %vm655 = vcmp.eq.s32.totalorder %v505, %v603
        %vm656 = vcmp.eq.s32.totalorder %v505, %v606
        %vm657 = vcmp.eq.s32.totalorder %v505, %v609
        %vm658 = vcmp.eq.s32.totalorder %v505, %v612
        %vm659 = vcmp.eq.s32.totalorder %v505, %v615
        %vm660 = vcmp.eq.s32.totalorder %v505, %v618
        %vm661 = vcmp.eq.s32.totalorder %v505, %v621
        %vm662 = vcmp.eq.s32.totalorder %v505, %v624
        %vm663 = vcmp.eq.s32.totalorder %v505, %v627
        %vm664 = vcmp.eq.s32.totalorder %v505, %v630
        %vm665 = vcmp.eq.s32.totalorder %v505, %v633
        %v666 = vsel %vm634, 1, 0
        %v667 = vsel %vm635, 1, 0
        %v668 = vsel %vm636, 1, 0
        %v669 = vsel %vm637, 1, 0
        %v670 = vsel %vm638, 1, 0
        %v671 = vsel %vm639, 1, 0
        %v672 = vsel %vm640, 1, 0
        %v673 = vsel %vm641, 1, 0
        %v674 = vsel %vm642, 1, 0
        %v675 = vsel %vm643, 1, 0
        %v676 = vsel %vm644, 1, 0
        %v677 = vsel %vm645, 1, 0
        %v678 = vsel %vm646, 1, 0
        %v679 = vsel %vm647, 1, 0
        %v680 = vsel %vm648, 1, 0
        %v681 = vsel %vm649, 1, 0
        %v682 = vsel %vm650, 1, 0
        %v683 = vsel %vm651, 1, 0
        %v684 = vsel %vm652, 1, 0
        %v685 = vsel %vm653, 1, 0
        %v686 = vsel %vm654, 1, 0
        %v687 = vsel %vm655, 1, 0
        %v688 = vsel %vm656, 1, 0
        %v689 = vsel %vm657, 1, 0
        %v690 = vsel %vm658, 1, 0
        %v691 = vsel %vm659, 1, 0
        %v692 = vsel %vm660, 1, 0
        %v693 = vsel %vm661, 1, 0
        %v694 = vsel %vm662, 1, 0
        %v695 = vsel %vm663, 1, 0
        %v696 = vsel %vm664, 1, 0
        %v697 = vsel %vm665, 1, 0
        %v698 = vcvt.s32.f32 %v666
        %v699 = vcvt.s32.f32 %v667
        %v700 = vcvt.s32.f32 %v668
        %v701 = vcvt.s32.f32 %v669
        %v702 = vcvt.s32.f32 %v670
        %v703 = vcvt.s32.f32 %v671
        %v704 = vcvt.s32.f32 %v672
        %v705 = vcvt.s32.f32 %v673
        %v706 = vcvt.s32.f32 %v674
        %v707 = vcvt.s32.f32 %v675
        %v708 = vcvt.s32.f32 %v676
        %v709 = vcvt.s32.f32 %v677
        %v710 = vcvt.s32.f32 %v678
        %v711 = vcvt.s32.f32 %v679
        %v712 = vcvt.s32.f32 %v680
        %v713 = vcvt.s32.f32 %v681
        %v714 = vcvt.s32.f32 %v682
        %v715 = vcvt.s32.f32 %v683
        %v716 = vcvt.s32.f32 %v684
        %v717 = vcvt.s32.f32 %v685
        %v718 = vcvt.s32.f32 %v686
        %v719 = vcvt.s32.f32 %v687
        %v720 = vcvt.s32.f32 %v688
        %v721 = vcvt.s32.f32 %v689
        %v722 = vcvt.s32.f32 %v690
        %v723 = vcvt.s32.f32 %v691
        %v724 = vcvt.s32.f32 %v692
        %v725 = vcvt.s32.f32 %v693
        %v726 = vcvt.s32.f32 %v694
        %v727 = vcvt.s32.f32 %v695
        %v728 = vcvt.s32.f32 %v696
        %v729 = vcvt.s32.f32 %v697
        %v730 = vld [vmem:[%s325] sm:$0xff]
        %v731 = vld [vmem:[%s325 + $0x8] sm:$0xff]
        %v732 = vld [vmem:[%s325 + $0x10] sm:$0xff]
        %v733 = vld [vmem:[%s325 + $0x18] sm:$0xff]
        %v734 = vld [vmem:[%s4] sm:$0xff]
        %v735 = vld [vmem:[%s4 + $0x8] sm:$0xff]
        %v736 = vld [vmem:[%s4 + $0x10] sm:$0xff]
        %v737 = vld [vmem:[%s4 + $0x18] sm:$0xff]
        %v738 = vld [vmem:[%s4 + $0x20] sm:$0xff]
        %v739 = vld [vmem:[%s4 + $0x28] sm:$0xff]
        %v740 = vld [vmem:[%s4 + $0x30] sm:$0xff]
        %v741 = vld [vmem:[%s4 + $0x38] sm:$0xff]
        %v742 = vld [vmem:[%s332] sm:$0xff]
        %v743 = vld [vmem:[%s332 + $0x8] sm:$0xff]
        %v744 = vld [vmem:[%s332 + $0x10] sm:$0xff]
        %v745 = vld [vmem:[%s332 + $0x18] sm:$0xff]
        %v746 = vld [vmem:[%s332 + $0x20] sm:$0xff]
        %v747 = vld [vmem:[%s332 + $0x28] sm:$0xff]
        %v748 = vld [vmem:[%s332 + $0x30] sm:$0xff]
        %v749 = vld [vmem:[%s332 + $0x38] sm:$0xff]
        %750 = vmatprep.subr.mxu0 %v503
        %751 = vmatpush1.msra.mxu0 %v502
        %752 = vmatprep.subr.mxu0 %v501
        %753 = vmatpush1.msra.mxu0 %v500
        %754 = vmatprep.subr.mxu0 %v499
        %755 = vmatpush1.msra.mxu0 %v498
        %756 = vmatprep.subr.mxu0 %v497
        %757 = vmatpush1.msra.mxu0 %v496
        %758 = vmatprep.subr.mxu0 %v495
        %759 = vmatpush1.msra.mxu0 %v494
        %760 = vmatprep.subr.mxu0 %v493
        %761 = vmatpush1.msra.mxu0 %v492
        %762 = vmatprep.subr.mxu0 %v491
        %763 = vmatpush1.msra.mxu0 %v490
        %764 = vmatprep.subr.mxu0 %v489
        %765 = vmatpush1.msra.mxu0 %v488
        %766 = vmatprep.subr.mxu0 %v487
        %767 = vmatpush1.msra.mxu0 %v486
        %768 = vmatprep.subr.mxu0 %v485
        %769 = vmatpush1.msra.mxu0 %v484
        %770 = vmatprep.subr.mxu0 %v483
        %771 = vmatpush1.msra.mxu0 %v482
        %772 = vmatprep.subr.mxu0 %v481
        %773 = vmatpush1.msra.mxu0 %v480
        %774 = vmatprep.subr.mxu0 %v479
        %775 = vmatpush1.msra.mxu0 %v478
        %776 = vmatprep.subr.mxu0 %v477
        %777 = vmatpush1.msra.mxu0 %v476
        %778 = vmatprep.subr.mxu0 %v475
        %779 = vmatpush1.msra.mxu0 %v474
        %780 = vmatprep.subr.mxu0 %v473
        %781 = vmatpush1.msra.mxu0 %v472
        %782 = vmatprep.subr.mxu0 0.0
        %783 = vmatpush2.msra.mxu0 0.0
        %784 = vmatprep.subr.mxu0 0.0
        %785 = vmatpush2.msra.mxu0 0.0
        %786 = vmatprep.subr.mxu0 0.0
        %787 = vmatpush2.msra.mxu0 0.0
        %788 = vmatprep.subr.mxu0 0.0
        %789 = vmatpush2.msra.mxu0 0.0
        %790 = vmatprep.subr.mxu0 0.0
        %791 = vmatpush2.msra.mxu0 0.0
        %792 = vmatprep.subr.mxu0 0.0
        %793 = vmatpush2.msra.mxu0 0.0
        %794 = vmatprep.subr.mxu0 0.0
        %795 = vmatpush2.msra.mxu0 0.0
        %796 = vmatprep.subr.mxu0 0.0
        %797 = vmatpush2.msra.mxu0 0.0
        %798 = vmatprep.subr.mxu0 0.0
        %799 = vmatpush2.msra.mxu0 0.0
        %800 = vmatprep.subr.mxu0 0.0
        %801 = vmatpush2.msra.mxu0 0.0
        %802 = vmatprep.subr.mxu0 0.0
        %803 = vmatpush2.msra.mxu0 0.0
        %804 = vmatprep.subr.mxu0 0.0
        %805 = vmatpush2.msra.mxu0 0.0
        %806 = vmatprep.subr.mxu0 0.0
        %807 = vmatpush2.msra.mxu0 0.0
        %808 = vmatprep.subr.mxu0 0.0
        %809 = vmatpush2.msra.mxu0 0.0
        %810 = vmatprep.subr.mxu0 0.0
        %811 = vmatpush2.msra.mxu0 0.0
        %812 = vmatprep.subr.mxu0 0.0
        %813 = vmatpush2.msra.mxu0 0.0
        %814 = vmatprep.mubr.f32.mxu0 0.0
        %815 = vmatmul.mubr.f32.gmra.mxu0 %v730
        %v816 = vpop.f32.mrf.mxu0
        %v817 = vadd.f32 %v742, %v816
        %v818 = vpop.f32.mrf.mxu0
        %v819 = vadd.f32 %v743, %v818
        %820 = vmatprep.mubr.f32.mxu0 0.0
        %821 = vmatmul.mubr.f32.gmra.mxu0 %v731
        %v822 = vpop.f32.mrf.mxu0
        %v823 = vadd.f32 %v744, %v822
        %v824 = vpop.f32.mrf.mxu0
        %v825 = vadd.f32 %v745, %v824
        %826 = vmatprep.mubr.f32.mxu0 0.0
        %827 = vmatmul.mubr.f32.gmra.mxu0 %v732
        %v828 = vpop.f32.mrf.mxu0
        %v829 = vadd.f32 %v746, %v828
        %v830 = vpop.f32.mrf.mxu0
        %v831 = vadd.f32 %v747, %v830
        %832 = vmatprep.mubr.f32.mxu0 0.0
        %833 = vmatmul.mubr.f32.gmra.mxu0 %v733
        %v834 = vpop.f32.mrf.mxu0
        %v835 = vadd.f32 %v748, %v834
        %v836 = vpop.f32.mrf.mxu0
        %v837 = vadd.f32 %v749, %v836
        %838 = vdwg.mxu0
        %v839 = vmax.f32 %v817, 0.0
        %v840 = vmax.f32 %v819, 0.0
        %v841 = vmax.f32 %v823, 0.0
        %v842 = vmax.f32 %v825, 0.0
        %v843 = vmax.f32 %v829, 0.0
        %v844 = vmax.f32 %v831, 0.0
        %v845 = vmax.f32 %v835, 0.0
        %v846 = vmax.f32 %v837, 0.0
        %847 = vmatprep.subr.mxu0 0.0
        %848 = vmatpush1.msra.mxu0 %v713
        %849 = vmatprep.subr.mxu0 0.0
        %850 = vmatpush1.msra.mxu0 %v712
        %851 = vmatprep.subr.mxu0 0.0
        %852 = vmatpush1.msra.mxu0 %v711
        %853 = vmatprep.subr.mxu0 0.0
        %854 = vmatpush1.msra.mxu0 %v710
        %855 = vmatprep.subr.mxu0 0.0
        %856 = vmatpush1.msra.mxu0 %v709
        %857 = vmatprep.subr.mxu0 0.0
        %858 = vmatpush1.msra.mxu0 %v708
        %859 = vmatprep.subr.mxu0 0.0
        %860 = vmatpush1.msra.mxu0 %v707
        %861 = vmatprep.subr.mxu0 0.0
        %862 = vmatpush1.msra.mxu0 %v706
        %863 = vmatprep.subr.mxu0 0.0
        %864 = vmatpush1.msra.mxu0 %v705
        %865 = vmatprep.subr.mxu0 0.0
        %866 = vmatpush1.msra.mxu0 %v704
        %867 = vmatprep.subr.mxu0 0.0
        %868 = vmatpush1.msra.mxu0 %v703
        %869 = vmatprep.subr.mxu0 0.0
        %870 = vmatpush1.msra.mxu0 %v702
        %871 = vmatprep.subr.mxu0 0.0
        %872 = vmatpush1.msra.mxu0 %v701
        %873 = vmatprep.subr.mxu0 0.0
        %874 = vmatpush1.msra.mxu0 %v700
        %875 = vmatprep.subr.mxu0 0.0
        %876 = vmatpush1.msra.mxu0 %v699
        %877 = vmatprep.subr.mxu0 0.0
        %878 = vmatpush1.msra.mxu0 %v698
        %879 = vmatprep.subr.mxu0 0.0
        %880 = vmatpush2.msra.mxu0 %v729
        %881 = vmatprep.subr.mxu0 0.0
        %882 = vmatpush2.msra.mxu0 %v728
        %883 = vmatprep.subr.mxu0 0.0
        %884 = vmatpush2.msra.mxu0 %v727
        %885 = vmatprep.subr.mxu0 0.0
        %886 = vmatpush2.msra.mxu0 %v726
        %887 = vmatprep.subr.mxu0 0.0
        %888 = vmatpush2.msra.mxu0 %v725
        %889 = vmatprep.subr.mxu0 0.0
        %890 = vmatpush2.msra.mxu0 %v724
        %891 = vmatprep.subr.mxu0 0.0
        %892 = vmatpush2.msra.mxu0 %v723
        %893 = vmatprep.subr.mxu0 0.0
        %894 = vmatpush2.msra.mxu0 %v722
        %895 = vmatprep.subr.mxu0 0.0
        %896 = vmatpush2.msra.mxu0 %v721
        %897 = vmatprep.subr.mxu0 0.0
        %898 = vmatpush2.msra.mxu0 %v720
        %899 = vmatprep.subr.mxu0 0.0
        %900 = vmatpush2.msra.mxu0 %v719
        %901 = vmatprep.subr.mxu0 0.0
        %902 = vmatpush2.msra.mxu0 %v718
        %903 = vmatprep.subr.mxu0 0.0
        %904 = vmatpush2.msra.mxu0 %v717
        %905 = vmatprep.subr.mxu0 0.0
        %906 = vmatpush2.msra.mxu0 %v716
        %907 = vmatprep.subr.mxu0 0.0
        %908 = vmatpush2.msra.mxu0 %v715
        %909 = vmatprep.subr.mxu0 0.0
        %910 = vmatpush2.msra.mxu0 %v714
        %911 = vmatprep.mubr.f32.mxu0 %v840
        %912 = vmatmul.mubr.f32.gmra.mxu0 %v839
        %v913 = vpop.f32.mrf.mxu0
        %v914 = vadd.f32 0.0, %v913
        %v915 = vpop.f32.mrf.mxu0
        %916 = vmatprep.mubr.f32.mxu0 %v842
        %917 = vmatmul.mubr.f32.gmra.mxu0 %v841
        %v918 = vpop.f32.mrf.mxu0
        %v919 = vadd.f32 0.0, %v918
        %v920 = vpop.f32.mrf.mxu0
        %921 = vmatprep.mubr.f32.mxu0 %v844
        %922 = vmatmul.mubr.f32.gmra.mxu0 %v843
        %v923 = vpop.f32.mrf.mxu0
        %v924 = vadd.f32 0.0, %v923
        %v925 = vpop.f32.mrf.mxu0
        %926 = vmatprep.mubr.f32.mxu0 %v846
        %927 = vmatmul.mubr.f32.gmra.mxu0 %v845
        %v928 = vpop.f32.mrf.mxu0
        %v929 = vadd.f32 0.0, %v928
        %v930 = vpop.f32.mrf.mxu0
        %931 = vdwg.mxu0
        %933 = vset.pattern.permute.xlu0 33
        %934 = vperm.xlu0 %933, %v734
        %v935 = vpop.permute.xlu0 %934
        %938 = vset.pattern.permute.xlu0 33
        %939 = vperm.xlu0 %938, %v735
        %v940 = vpop.permute.xlu0 %939
        %943 = vset.pattern.permute.xlu0 33
        %944 = vperm.xlu0 %943, %v736
        %v945 = vpop.permute.xlu0 %944
        %948 = vset.pattern.permute.xlu0 33
        %949 = vperm.xlu0 %948, %v737
        %v950 = vpop.permute.xlu0 %949
        %v952 = vmul.f32 %v935, %v730
        %v953 = vmul.f32 %v940, %v731
        %v954 = vmul.f32 %v945, %v732
        %v955 = vmul.f32 %v950, %v733
        %v956 = vadd.f32 %v952, %v914
        %v957 = vadd.f32 %v953, %v919
        %v958 = vadd.f32 %v954, %v924
        %v959 = vadd.f32 %v955, %v929
        %960 = vset.pattern.permute.xlu0 32
        %961 = vperm.xlu0 %960, %v734
        %v962 = vpop.permute.xlu0 %961
        %964 = vset.pattern.permute.xlu0 32
        %965 = vperm.xlu0 %964, %v735
        %v966 = vpop.permute.xlu0 %965
        %968 = vset.pattern.permute.xlu0 32
        %969 = vperm.xlu0 %968, %v736
        %v970 = vpop.permute.xlu0 %969
        %972 = vset.pattern.permute.xlu0 32
        %973 = vperm.xlu0 %972, %v737
        %v974 = vpop.permute.xlu0 %973
        %977 = vset.pattern.permute.xlu0 32
        %978 = vperm.xlu0 %977, %v738
        %v979 = vpop.permute.xlu0 %978
        %982 = vset.pattern.permute.xlu0 32
        %983 = vperm.xlu0 %982, %v739
        %v984 = vpop.permute.xlu0 %983
        %987 = vset.pattern.permute.xlu0 32
        %988 = vperm.xlu0 %987, %v740
        %v989 = vpop.permute.xlu0 %988
        %992 = vset.pattern.permute.xlu0 32
        %993 = vperm.xlu0 %992, %v741
        %v994 = vpop.permute.xlu0 %993
        %vm996 = vcmask 261120
        %v997 = vsel %vm996, %v734, 0
        %v999 = vsel %vm996, %v735, 0
        %v1001 = vsel %vm996, %v736, 0
        %v1003 = vsel %vm996, %v737, 0
        %v1005 = vsel %vm996, %v738, 0
        %v1007 = vsel %vm996, %v739, 0
        %v1009 = vsel %vm996, %v740, 0
        %v1011 = vsel %vm996, %v741, 0
        %1013 = vmatprep.subr.mxu0 0.0
        %1014 = vmatpush1.msra.mxu0 0.0
        %1015 = vmatprep.subr.mxu0 0.0
        %1016 = vmatpush1.msra.mxu0 0.0
        %1017 = vmatprep.subr.mxu0 0.0
        %1018 = vmatpush1.msra.mxu0 0.0
        %1019 = vmatprep.subr.mxu0 0.0
        %1020 = vmatpush1.msra.mxu0 0.0
        %1021 = vmatprep.subr.mxu0 0.0
        %1022 = vmatpush1.msra.mxu0 0.0
        %1023 = vmatprep.subr.mxu0 0.0
        %1024 = vmatpush1.msra.mxu0 0.0
        %1025 = vmatprep.subr.mxu0 0.0
        %1026 = vmatpush1.msra.mxu0 0.0
        %1027 = vmatprep.subr.mxu0 0.0
        %1028 = vmatpush1.msra.mxu0 0.0
        %1029 = vmatprep.subr.mxu0 0.0
        %1030 = vmatpush1.msra.mxu0 0.0
        %1031 = vmatprep.subr.mxu0 0.0
        %1032 = vmatpush1.msra.mxu0 0.0
        %1033 = vmatprep.subr.mxu0 0.0
        %1034 = vmatpush1.msra.mxu0 0.0
        %1035 = vmatprep.subr.mxu0 0.0
        %1036 = vmatpush1.msra.mxu0 0.0
        %1037 = vmatprep.subr.mxu0 0.0
        %1038 = vmatpush1.msra.mxu0 %v959
        %1039 = vmatprep.subr.mxu0 0.0
        %1040 = vmatpush1.msra.mxu0 %v958
        %1041 = vmatprep.subr.mxu0 0.0
        %1042 = vmatpush1.msra.mxu0 %v957
        %1043 = vmatprep.subr.mxu0 0.0
        %1044 = vmatpush1.msra.mxu0 %v956
        %1045 = vmatprep.subr.mxu0 0.0
        %1046 = vmatpush2.msra.mxu0 0.0
        %1047 = vmatprep.subr.mxu0 0.0
        %1048 = vmatpush2.msra.mxu0 0.0
        %1049 = vmatprep.subr.mxu0 0.0
        %1050 = vmatpush2.msra.mxu0 0.0
        %1051 = vmatprep.subr.mxu0 0.0
        %1052 = vmatpush2.msra.mxu0 0.0
        %1053 = vmatprep.subr.mxu0 0.0
        %1054 = vmatpush2.msra.mxu0 0.0
        %1055 = vmatprep.subr.mxu0 0.0
        %1056 = vmatpush2.msra.mxu0 0.0
        %1057 = vmatprep.subr.mxu0 0.0
        %1058 = vmatpush2.msra.mxu0 0.0
        %1059 = vmatprep.subr.mxu0 0.0
        %1060 = vmatpush2.msra.mxu0 0.0
        %1061 = vmatprep.subr.mxu0 0.0
        %1062 = vmatpush2.msra.mxu0 0.0
        %1063 = vmatprep.subr.mxu0 0.0
        %1064 = vmatpush2.msra.mxu0 0.0
        %1065 = vmatprep.subr.mxu0 0.0
        %1066 = vmatpush2.msra.mxu0 0.0
        %1067 = vmatprep.subr.mxu0 0.0
        %1068 = vmatpush2.msra.mxu0 0.0
        %1069 = vmatprep.subr.mxu0 0.0
        %1070 = vmatpush2.msra.mxu0 0.0
        %1071 = vmatprep.subr.mxu0 0.0
        %1072 = vmatpush2.msra.mxu0 0.0
        %1073 = vmatprep.subr.mxu0 0.0
        %1074 = vmatpush2.msra.mxu0 0.0
        %1075 = vmatprep.subr.mxu0 0.0
        %1076 = vmatpush2.msra.mxu0 0.0
        %1077 = vmatprep.mubr.f32.mxu0 0.0
        %1078 = vmatmul.mubr.f32.gmra.mxu0 %v997
        %v1079 = vpop.f32.mrf.mxu0
        %v1080 = vadd.f32 %v962, %v1079
        %v1081 = vpop.f32.mrf.mxu0
        %1082 = vmatprep.mubr.f32.mxu0 0.0
        %1083 = vmatmul.mubr.f32.gmra.mxu0 %v999
        %v1084 = vpop.f32.mrf.mxu0
        %v1085 = vadd.f32 %v966, %v1084
        %v1086 = vpop.f32.mrf.mxu0
        %1087 = vmatprep.mubr.f32.mxu0 0.0
        %1088 = vmatmul.mubr.f32.gmra.mxu0 %v1001
        %v1089 = vpop.f32.mrf.mxu0
        %v1090 = vadd.f32 %v970, %v1089
        %v1091 = vpop.f32.mrf.mxu0
        %1092 = vmatprep.mubr.f32.mxu0 0.0
        %1093 = vmatmul.mubr.f32.gmra.mxu0 %v1003
        %v1094 = vpop.f32.mrf.mxu0
        %v1095 = vadd.f32 %v974, %v1094
        %v1096 = vpop.f32.mrf.mxu0
        %1097 = vmatprep.mubr.f32.mxu0 0.0
        %1098 = vmatmul.mubr.f32.gmra.mxu0 %v1005
        %v1099 = vpop.f32.mrf.mxu0
        %v1100 = vadd.f32 %v979, %v1099
        %v1101 = vpop.f32.mrf.mxu0
        %1102 = vmatprep.mubr.f32.mxu0 0.0
        %1103 = vmatmul.mubr.f32.gmra.mxu0 %v1007
        %v1104 = vpop.f32.mrf.mxu0
        %v1105 = vadd.f32 %v984, %v1104
        %v1106 = vpop.f32.mrf.mxu0
        %1107 = vmatprep.mubr.f32.mxu0 0.0
        %1108 = vmatmul.mubr.f32.gmra.mxu0 %v1009
        %v1109 = vpop.f32.mrf.mxu0
        %v1110 = vadd.f32 %v989, %v1109
        %v1111 = vpop.f32.mrf.mxu0
        %1112 = vmatprep.mubr.f32.mxu0 0.0
        %1113 = vmatmul.mubr.f32.gmra.mxu0 %v1011
        %v1114 = vpop.f32.mrf.mxu0
        %v1115 = vadd.f32 %v994, %v1114
        %v1116 = vpop.f32.mrf.mxu0
        %1117 = vdwg.mxu0
        %v1118 = vmax.f32 %v1080, 0.0
        %v1119 = vmax.f32 %v1085, 0.0
        %v1120 = vmax.f32 %v1090, 0.0
        %v1121 = vmax.f32 %v1095, 0.0
        %v1122 = vmax.f32 %v1100, 0.0
        %v1123 = vmax.f32 %v1105, 0.0
        %v1124 = vmax.f32 %v1110, 0.0
        %v1125 = vmax.f32 %v1115, 0.0
        %1126 = vset.pattern.permute.xlu0 34
        %1127 = vperm.xlu0 %1126, %v734
        %v1128 = vpop.permute.xlu0 %1127
        %1130 = vset.pattern.permute.xlu0 34
        %1131 = vperm.xlu0 %1130, %v735
        %v1132 = vpop.permute.xlu0 %1131
        %1134 = vset.pattern.permute.xlu0 34
        %1135 = vperm.xlu0 %1134, %v736
        %v1136 = vpop.permute.xlu0 %1135
        %1138 = vset.pattern.permute.xlu0 34
        %1139 = vperm.xlu0 %1138, %v737
        %v1140 = vpop.permute.xlu0 %1139
        %1142 = vrot.lane.b32.xlu0 %v734, 64
        %v1143 = vpop.permute.xlu0 %1142
        %1144 = vrot.lane.b32.xlu0 %v735, 64
        %v1145 = vpop.permute.xlu0 %1144
        %1146 = vrot.lane.b32.xlu0 %v736, 64
        %v1147 = vpop.permute.xlu0 %1146
        %1148 = vrot.lane.b32.xlu0 %v737, 64
        %v1149 = vpop.permute.xlu0 %1148
        %vm1150 = vcmask 523264
        %v1151 = vsel %vm1150, %v1143, 0
        %v1153 = vsel %vm1150, %v1145, 0
        %v1155 = vsel %vm1150, %v1147, 0
        %v1157 = vsel %vm1150, %v1149, 0
        %1159 = vmatprep.subr.mxu0 0.0
        %1160 = vmatpush1.msra.mxu0 0.0
        %1161 = vmatprep.subr.mxu0 0.0
        %1162 = vmatpush1.msra.mxu0 0.0
        %1163 = vmatprep.subr.mxu0 0.0
        %1164 = vmatpush1.msra.mxu0 0.0
        %1165 = vmatprep.subr.mxu0 0.0
        %1166 = vmatpush1.msra.mxu0 0.0
        %1167 = vmatprep.subr.mxu0 0.0
        %1168 = vmatpush1.msra.mxu0 0.0
        %1169 = vmatprep.subr.mxu0 0.0
        %1170 = vmatpush1.msra.mxu0 0.0
        %1171 = vmatprep.subr.mxu0 0.0
        %1172 = vmatpush1.msra.mxu0 0.0
        %1173 = vmatprep.subr.mxu0 0.0
        %1174 = vmatpush1.msra.mxu0 0.0
        %1175 = vmatprep.subr.mxu0 0.0
        %1176 = vmatpush1.msra.mxu0 %v1125
        %1177 = vmatprep.subr.mxu0 0.0
        %1178 = vmatpush1.msra.mxu0 %v1124
        %1179 = vmatprep.subr.mxu0 0.0
        %1180 = vmatpush1.msra.mxu0 %v1123
        %1181 = vmatprep.subr.mxu0 0.0
        %1182 = vmatpush1.msra.mxu0 %v1122
        %1183 = vmatprep.subr.mxu0 0.0
        %1184 = vmatpush1.msra.mxu0 %v1121
        %1185 = vmatprep.subr.mxu0 0.0
        %1186 = vmatpush1.msra.mxu0 %v1120
        %1187 = vmatprep.subr.mxu0 0.0
        %1188 = vmatpush1.msra.mxu0 %v1119
        %1189 = vmatprep.subr.mxu0 0.0
        %1190 = vmatpush1.msra.mxu0 %v1118
        %1191 = vmatprep.subr.mxu0 0.0
        %1192 = vmatpush2.msra.mxu0 0.0
        %1193 = vmatprep.subr.mxu0 0.0
        %1194 = vmatpush2.msra.mxu0 0.0
        %1195 = vmatprep.subr.mxu0 0.0
        %1196 = vmatpush2.msra.mxu0 0.0
        %1197 = vmatprep.subr.mxu0 0.0
        %1198 = vmatpush2.msra.mxu0 0.0
        %1199 = vmatprep.subr.mxu0 0.0
        %1200 = vmatpush2.msra.mxu0 0.0
        %1201 = vmatprep.subr.mxu0 0.0
        %1202 = vmatpush2.msra.mxu0 0.0
        %1203 = vmatprep.subr.mxu0 0.0
        %1204 = vmatpush2.msra.mxu0 0.0
        %1205 = vmatprep.subr.mxu0 0.0
        %1206 = vmatpush2.msra.mxu0 0.0
        %1207 = vmatprep.subr.mxu0 0.0
        %1208 = vmatpush2.msra.mxu0 0.0
        %1209 = vmatprep.subr.mxu0 0.0
        %1210 = vmatpush2.msra.mxu0 0.0
        %1211 = vmatprep.subr.mxu0 0.0
        %1212 = vmatpush2.msra.mxu0 0.0
        %1213 = vmatprep.subr.mxu0 0.0
        %1214 = vmatpush2.msra.mxu0 0.0
        %1215 = vmatprep.subr.mxu0 0.0
        %1216 = vmatpush2.msra.mxu0 0.0
        %1217 = vmatprep.subr.mxu0 0.0
        %1218 = vmatpush2.msra.mxu0 0.0
        %1219 = vmatprep.subr.mxu0 0.0
        %1220 = vmatpush2.msra.mxu0 0.0
        %1221 = vmatprep.subr.mxu0 0.0
        %1222 = vmatpush2.msra.mxu0 0.0
        %1223 = vmatprep.mubr.f32.mxu0 0.0
        %1224 = vmatmul.mubr.f32.gmra.mxu0 %v1151
        %v1225 = vpop.f32.mrf.mxu0
        %v1226 = vadd.f32 %v1128, %v1225
        %v1227 = vpop.f32.mrf.mxu0
        %1228 = vmatprep.mubr.f32.mxu0 0.0
        %1229 = vmatmul.mubr.f32.gmra.mxu0 %v1153
        %v1230 = vpop.f32.mrf.mxu0
        %v1231 = vadd.f32 %v1132, %v1230
        %v1232 = vpop.f32.mrf.mxu0
        %1233 = vmatprep.mubr.f32.mxu0 0.0
        %1234 = vmatmul.mubr.f32.gmra.mxu0 %v1155
        %v1235 = vpop.f32.mrf.mxu0
        %v1236 = vadd.f32 %v1136, %v1235
        %v1237 = vpop.f32.mrf.mxu0
        %1238 = vmatprep.mubr.f32.mxu0 0.0
        %1239 = vmatmul.mubr.f32.gmra.mxu0 %v1157
        %v1240 = vpop.f32.mrf.mxu0
        %v1241 = vadd.f32 %v1140, %v1240
        %v1242 = vpop.f32.mrf.mxu0
        %1243 = vdwg.mxu0
        %v1244 = vmax.f32 %v1226, 0.0
        %v1245 = vmax.f32 %v1231, 0.0
        %v1246 = vmax.f32 %v1236, 0.0
        %v1247 = vmax.f32 %v1241, 0.0
        %s1248 = scalar_lea.vmem %s4, 64
        %v1249 = vld [vmem:[%s1248] sm:$0xff]
        %v1250 = vld [vmem:[%s1248 + $0x8] sm:$0xff]
        %v1251 = vld [vmem:[%s1248 + $0x10] sm:$0xff]
        %v1252 = vld [vmem:[%s1248 + $0x18] sm:$0xff]
        %v1253 = vld [vmem:[%s1248 + $0x20] sm:$0xff]
        %v1254 = vld [vmem:[%s1248 + $0x28] sm:$0xff]
        %v1255 = vld [vmem:[%s1248 + $0x30] sm:$0xff]
        %v1256 = vld [vmem:[%s1248 + $0x38] sm:$0xff]
        %s1257 = scalar_lea.vmem %s332, 64 [#allocation3]
        %v1258 = vld [vmem:[%s1257] sm:$0xff]
        %v1259 = vld [vmem:[%s1257 + $0x8] sm:$0xff]
        %v1260 = vld [vmem:[%s1257 + $0x10] sm:$0xff]
        %v1261 = vld [vmem:[%s1257 + $0x18] sm:$0xff]
        %v1262 = vld [vmem:[%s1257 + $0x20] sm:$0xff]
        %v1263 = vld [vmem:[%s1257 + $0x28] sm:$0xff]
        %v1264 = vld [vmem:[%s1257 + $0x30] sm:$0xff]
        %v1265 = vld [vmem:[%s1257 + $0x38] sm:$0xff]
        %1266 = vmatprep.subr.mxu0 %v503
        %1267 = vmatpush1.msra.mxu0 %v502
        %1268 = vmatprep.subr.mxu0 %v501
        %1269 = vmatpush1.msra.mxu0 %v500
        %1270 = vmatprep.subr.mxu0 %v499
        %1271 = vmatpush1.msra.mxu0 %v498
        %1272 = vmatprep.subr.mxu0 %v497
        %1273 = vmatpush1.msra.mxu0 %v496
        %1274 = vmatprep.subr.mxu0 %v495
        %1275 = vmatpush1.msra.mxu0 %v494
        %1276 = vmatprep.subr.mxu0 %v493
        %1277 = vmatpush1.msra.mxu0 %v492
        %1278 = vmatprep.subr.mxu0 %v491
        %1279 = vmatpush1.msra.mxu0 %v490
        %1280 = vmatprep.subr.mxu0 %v489
        %1281 = vmatpush1.msra.mxu0 %v488
        %1282 = vmatprep.subr.mxu0 %v487
        %1283 = vmatpush1.msra.mxu0 %v486
        %1284 = vmatprep.subr.mxu0 %v485
        %1285 = vmatpush1.msra.mxu0 %v484
        %1286 = vmatprep.subr.mxu0 %v483
        %1287 = vmatpush1.msra.mxu0 %v482
        %1288 = vmatprep.subr.mxu0 %v481
        %1289 = vmatpush1.msra.mxu0 %v480
        %1290 = vmatprep.subr.mxu0 %v479
        %1291 = vmatpush1.msra.mxu0 %v478
        %1292 = vmatprep.subr.mxu0 %v477
        %1293 = vmatpush1.msra.mxu0 %v476
        %1294 = vmatprep.subr.mxu0 %v475
        %1295 = vmatpush1.msra.mxu0 %v474
        %1296 = vmatprep.subr.mxu0 %v473
        %1297 = vmatpush1.msra.mxu0 %v472
        %1298 = vmatprep.subr.mxu0 0.0
        %1299 = vmatpush2.msra.mxu0 0.0
        %1300 = vmatprep.subr.mxu0 0.0
        %1301 = vmatpush2.msra.mxu0 0.0
        %1302 = vmatprep.subr.mxu0 0.0
        %1303 = vmatpush2.msra.mxu0 0.0
        %1304 = vmatprep.subr.mxu0 0.0
        %1305 = vmatpush2.msra.mxu0 0.0
        %1306 = vmatprep.subr.mxu0 0.0
        %1307 = vmatpush2.msra.mxu0 0.0
        %1308 = vmatprep.subr.mxu0 0.0
        %1309 = vmatpush2.msra.mxu0 0.0
        %1310 = vmatprep.subr.mxu0 0.0
        %1311 = vmatpush2.msra.mxu0 0.0
        %1312 = vmatprep.subr.mxu0 0.0
        %1313 = vmatpush2.msra.mxu0 0.0
        %1314 = vmatprep.subr.mxu0 0.0
        %1315 = vmatpush2.msra.mxu0 0.0
        %1316 = vmatprep.subr.mxu0 0.0
        %1317 = vmatpush2.msra.mxu0 0.0
        %1318 = vmatprep.subr.mxu0 0.0
        %1319 = vmatpush2.msra.mxu0 0.0
        %1320 = vmatprep.subr.mxu0 0.0
        %1321 = vmatpush2.msra.mxu0 0.0
        %1322 = vmatprep.subr.mxu0 0.0
        %1323 = vmatpush2.msra.mxu0 0.0
        %1324 = vmatprep.subr.mxu0 0.0
        %1325 = vmatpush2.msra.mxu0 0.0
        %1326 = vmatprep.subr.mxu0 0.0
        %1327 = vmatpush2.msra.mxu0 0.0
        %1328 = vmatprep.subr.mxu0 0.0
        %1329 = vmatpush2.msra.mxu0 0.0
        %1330 = vmatprep.mubr.f32.mxu0 0.0
        %1331 = vmatmul.mubr.f32.gmra.mxu0 %v1244
        %v1332 = vpop.f32.mrf.mxu0
        %v1333 = vadd.f32 %v1258, %v1332
        %v1334 = vpop.f32.mrf.mxu0
        %v1335 = vadd.f32 %v1259, %v1334
        %1336 = vmatprep.mubr.f32.mxu0 0.0
        %1337 = vmatmul.mubr.f32.gmra.mxu0 %v1245
        %v1338 = vpop.f32.mrf.mxu0
        %v1339 = vadd.f32 %v1260, %v1338
        %v1340 = vpop.f32.mrf.mxu0
        %v1341 = vadd.f32 %v1261, %v1340
        %1342 = vmatprep.mubr.f32.mxu0 0.0
        %1343 = vmatmul.mubr.f32.gmra.mxu0 %v1246
        %v1344 = vpop.f32.mrf.mxu0
        %v1345 = vadd.f32 %v1262, %v1344
        %v1346 = vpop.f32.mrf.mxu0
        %v1347 = vadd.f32 %v1263, %v1346
        %1348 = vmatprep.mubr.f32.mxu0 0.0
        %1349 = vmatmul.mubr.f32.gmra.mxu0 %v1247
        %v1350 = vpop.f32.mrf.mxu0
        %v1351 = vadd.f32 %v1264, %v1350
        %v1352 = vpop.f32.mrf.mxu0
        %v1353 = vadd.f32 %v1265, %v1352
        %1354 = vdwg.mxu0
        %v1355 = vmax.f32 %v1333, 0.0
        %v1356 = vmax.f32 %v1335, 0.0
        %v1357 = vmax.f32 %v1339, 0.0
        %v1358 = vmax.f32 %v1341, 0.0
        %v1359 = vmax.f32 %v1345, 0.0
        %v1360 = vmax.f32 %v1347, 0.0
        %v1361 = vmax.f32 %v1351, 0.0
        %v1362 = vmax.f32 %v1353, 0.0
        %1363 = vmatprep.subr.mxu0 0.0
        %1364 = vmatpush1.msra.mxu0 %v713
        %1365 = vmatprep.subr.mxu0 0.0
        %1366 = vmatpush1.msra.mxu0 %v712
        %1367 = vmatprep.subr.mxu0 0.0
        %1368 = vmatpush1.msra.mxu0 %v711
        %1369 = vmatprep.subr.mxu0 0.0
        %1370 = vmatpush1.msra.mxu0 %v710
        %1371 = vmatprep.subr.mxu0 0.0
        %1372 = vmatpush1.msra.mxu0 %v709
        %1373 = vmatprep.subr.mxu0 0.0
        %1374 = vmatpush1.msra.mxu0 %v708
        %1375 = vmatprep.subr.mxu0 0.0
        %1376 = vmatpush1.msra.mxu0 %v707
        %1377 = vmatprep.subr.mxu0 0.0
        %1378 = vmatpush1.msra.mxu0 %v706
        %1379 = vmatprep.subr.mxu0 0.0
        %1380 = vmatpush1.msra.mxu0 %v705
        %1381 = vmatprep.subr.mxu0 0.0
        %1382 = vmatpush1.msra.mxu0 %v704
        %1383 = vmatprep.subr.mxu0 0.0
        %1384 = vmatpush1.msra.mxu0 %v703
        %1385 = vmatprep.subr.mxu0 0.0
        %1386 = vmatpush1.msra.mxu0 %v702
        %1387 = vmatprep.subr.mxu0 0.0
        %1388 = vmatpush1.msra.mxu0 %v701
        %1389 = vmatprep.subr.mxu0 0.0
        %1390 = vmatpush1.msra.mxu0 %v700
        %1391 = vmatprep.subr.mxu0 0.0
        %1392 = vmatpush1.msra.mxu0 %v699
        %1393 = vmatprep.subr.mxu0 0.0
        %1394 = vmatpush1.msra.mxu0 %v698
        %1395 = vmatprep.subr.mxu0 0.0
        %1396 = vmatpush2.msra.mxu0 %v729
        %1397 = vmatprep.subr.mxu0 0.0
        %1398 = vmatpush2.msra.mxu0 %v728
        %1399 = vmatprep.subr.mxu0 0.0
        %1400 = vmatpush2.msra.mxu0 %v727
        %1401 = vmatprep.subr.mxu0 0.0
        %1402 = vmatpush2.msra.mxu0 %v726
        %1403 = vmatprep.subr.mxu0 0.0
        %1404 = vmatpush2.msra.mxu0 %v725
        %1405 = vmatprep.subr.mxu0 0.0
        %1406 = vmatpush2.msra.mxu0 %v724
        %1407 = vmatprep.subr.mxu0 0.0
        %1408 = vmatpush2.msra.mxu0 %v723
        %1409 = vmatprep.subr.mxu0 0.0
        %1410 = vmatpush2.msra.mxu0 %v722
        %1411 = vmatprep.subr.mxu0 0.0
        %1412 = vmatpush2.msra.mxu0 %v721
        %1413 = vmatprep.subr.mxu0 0.0
        %1414 = vmatpush2.msra.mxu0 %v720
        %1415 = vmatprep.subr.mxu0 0.0
        %1416 = vmatpush2.msra.mxu0 %v719
        %1417 = vmatprep.subr.mxu0 0.0
        %1418 = vmatpush2.msra.mxu0 %v718
        %1419 = vmatprep.subr.mxu0 0.0
        %1420 = vmatpush2.msra.mxu0 %v717
        %1421 = vmatprep.subr.mxu0 0.0
        %1422 = vmatpush2.msra.mxu0 %v716
        %1423 = vmatprep.subr.mxu0 0.0
        %1424 = vmatpush2.msra.mxu0 %v715
        %1425 = vmatprep.subr.mxu0 0.0
        %1426 = vmatpush2.msra.mxu0 %v714
        %1427 = vmatprep.mubr.f32.mxu0 %v1356
        %1428 = vmatmul.mubr.f32.gmra.mxu0 %v1355
        %v1429 = vpop.f32.mrf.mxu0
        %v1430 = vadd.f32 0.0, %v1429
        %v1431 = vpop.f32.mrf.mxu0
        %1432 = vmatprep.mubr.f32.mxu0 %v1358
        %1433 = vmatmul.mubr.f32.gmra.mxu0 %v1357
        %v1434 = vpop.f32.mrf.mxu0
        %v1435 = vadd.f32 0.0, %v1434
        %v1436 = vpop.f32.mrf.mxu0
        %1437 = vmatprep.mubr.f32.mxu0 %v1360
        %1438 = vmatmul.mubr.f32.gmra.mxu0 %v1359
        %v1439 = vpop.f32.mrf.mxu0
        %v1440 = vadd.f32 0.0, %v1439
        %v1441 = vpop.f32.mrf.mxu0
        %1442 = vmatprep.mubr.f32.mxu0 %v1362
        %1443 = vmatmul.mubr.f32.gmra.mxu0 %v1361
        %v1444 = vpop.f32.mrf.mxu0
        %v1445 = vadd.f32 0.0, %v1444
        %v1446 = vpop.f32.mrf.mxu0
        %1447 = vdwg.mxu0
        %1449 = vset.pattern.permute.xlu0 33
        %1450 = vperm.xlu0 %1449, %v1249
        %v1451 = vpop.permute.xlu0 %1450
        %1454 = vset.pattern.permute.xlu0 33
        %1455 = vperm.xlu0 %1454, %v1250
        %v1456 = vpop.permute.xlu0 %1455
        %1459 = vset.pattern.permute.xlu0 33
        %1460 = vperm.xlu0 %1459, %v1251
        %v1461 = vpop.permute.xlu0 %1460
        %1464 = vset.pattern.permute.xlu0 33
        %1465 = vperm.xlu0 %1464, %v1252
        %v1466 = vpop.permute.xlu0 %1465
        %v1468 = vmul.f32 %v1451, %v1244
        %v1469 = vmul.f32 %v1456, %v1245
        %v1470 = vmul.f32 %v1461, %v1246
        %v1471 = vmul.f32 %v1466, %v1247
        %v1472 = vadd.f32 %v1468, %v1430
        %v1473 = vadd.f32 %v1469, %v1435
        %v1474 = vadd.f32 %v1470, %v1440
        %v1475 = vadd.f32 %v1471, %v1445
        %1476 = vset.pattern.permute.xlu0 32
        %1477 = vperm.xlu0 %1476, %v1249
        %v1478 = vpop.permute.xlu0 %1477
        %1480 = vset.pattern.permute.xlu0 32
        %1481 = vperm.xlu0 %1480, %v1250
        %v1482 = vpop.permute.xlu0 %1481
        %1484 = vset.pattern.permute.xlu0 32
        %1485 = vperm.xlu0 %1484, %v1251
        %v1486 = vpop.permute.xlu0 %1485
        %1488 = vset.pattern.permute.xlu0 32
        %1489 = vperm.xlu0 %1488, %v1252
        %v1490 = vpop.permute.xlu0 %1489
        %1493 = vset.pattern.permute.xlu0 32
        %1494 = vperm.xlu0 %1493, %v1253
        %v1495 = vpop.permute.xlu0 %1494
        %1498 = vset.pattern.permute.xlu0 32
        %1499 = vperm.xlu0 %1498, %v1254
        %v1500 = vpop.permute.xlu0 %1499
        %1503 = vset.pattern.permute.xlu0 32
        %1504 = vperm.xlu0 %1503, %v1255
        %v1505 = vpop.permute.xlu0 %1504
        %1508 = vset.pattern.permute.xlu0 32
        %1509 = vperm.xlu0 %1508, %v1256
        %v1510 = vpop.permute.xlu0 %1509
        %v1512 = vsel %vm996, %v1249, 0
        %v1514 = vsel %vm996, %v1250, 0
        %v1516 = vsel %vm996, %v1251, 0
        %v1518 = vsel %vm996, %v1252, 0
        %v1520 = vsel %vm996, %v1253, 0
        %v1522 = vsel %vm996, %v1254, 0
        %v1524 = vsel %vm996, %v1255, 0
        %v1526 = vsel %vm996, %v1256, 0
        %1528 = vmatprep.subr.mxu0 0.0
        %1529 = vmatpush1.msra.mxu0 0.0
        %1530 = vmatprep.subr.mxu0 0.0
        %1531 = vmatpush1.msra.mxu0 0.0
        %1532 = vmatprep.subr.mxu0 0.0
        %1533 = vmatpush1.msra.mxu0 0.0
        %1534 = vmatprep.subr.mxu0 0.0
        %1535 = vmatpush1.msra.mxu0 0.0
        %1536 = vmatprep.subr.mxu0 0.0
        %1537 = vmatpush1.msra.mxu0 0.0
        %1538 = vmatprep.subr.mxu0 0.0
        %1539 = vmatpush1.msra.mxu0 0.0
        %1540 = vmatprep.subr.mxu0 0.0
        %1541 = vmatpush1.msra.mxu0 0.0
        %1542 = vmatprep.subr.mxu0 0.0
        %1543 = vmatpush1.msra.mxu0 0.0
        %1544 = vmatprep.subr.mxu0 0.0
        %1545 = vmatpush1.msra.mxu0 0.0
        %1546 = vmatprep.subr.mxu0 0.0
        %1547 = vmatpush1.msra.mxu0 0.0
        %1548 = vmatprep.subr.mxu0 0.0
        %1549 = vmatpush1.msra.mxu0 0.0
        %1550 = vmatprep.subr.mxu0 0.0
        %1551 = vmatpush1.msra.mxu0 0.0
        %1552 = vmatprep.subr.mxu0 0.0
        %1553 = vmatpush1.msra.mxu0 %v1475
        %1554 = vmatprep.subr.mxu0 0.0
        %1555 = vmatpush1.msra.mxu0 %v1474
        %1556 = vmatprep.subr.mxu0 0.0
        %1557 = vmatpush1.msra.mxu0 %v1473
        %1558 = vmatprep.subr.mxu0 0.0
        %1559 = vmatpush1.msra.mxu0 %v1472
        %1560 = vmatprep.subr.mxu0 0.0
        %1561 = vmatpush2.msra.mxu0 0.0
        %1562 = vmatprep.subr.mxu0 0.0
        %1563 = vmatpush2.msra.mxu0 0.0
        %1564 = vmatprep.subr.mxu0 0.0
        %1565 = vmatpush2.msra.mxu0 0.0
        %1566 = vmatprep.subr.mxu0 0.0
        %1567 = vmatpush2.msra.mxu0 0.0
        %1568 = vmatprep.subr.mxu0 0.0
        %1569 = vmatpush2.msra.mxu0 0.0
        %1570 = vmatprep.subr.mxu0 0.0
        %1571 = vmatpush2.msra.mxu0 0.0
        %1572 = vmatprep.subr.mxu0 0.0
        %1573 = vmatpush2.msra.mxu0 0.0
        %1574 = vmatprep.subr.mxu0 0.0
        %1575 = vmatpush2.msra.mxu0 0.0
        %1576 = vmatprep.subr.mxu0 0.0
        %1577 = vmatpush2.msra.mxu0 0.0
        %1578 = vmatprep.subr.mxu0 0.0
        %1579 = vmatpush2.msra.mxu0 0.0
        %1580 = vmatprep.subr.mxu0 0.0
        %1581 = vmatpush2.msra.mxu0 0.0
        %1582 = vmatprep.subr.mxu0 0.0
        %1583 = vmatpush2.msra.mxu0 0.0
        %1584 = vmatprep.subr.mxu0 0.0
        %1585 = vmatpush2.msra.mxu0 0.0
        %1586 = vmatprep.subr.mxu0 0.0
        %1587 = vmatpush2.msra.mxu0 0.0
        %1588 = vmatprep.subr.mxu0 0.0
        %1589 = vmatpush2.msra.mxu0 0.0
        %1590 = vmatprep.subr.mxu0 0.0
        %1591 = vmatpush2.msra.mxu0 0.0
        %1592 = vmatprep.mubr.f32.mxu0 0.0
        %1593 = vmatmul.mubr.f32.gmra.mxu0 %v1512
        %v1594 = vpop.f32.mrf.mxu0
        %v1595 = vadd.f32 %v1478, %v1594
        %v1596 = vpop.f32.mrf.mxu0
        %1597 = vmatprep.mubr.f32.mxu0 0.0
        %1598 = vmatmul.mubr.f32.gmra.mxu0 %v1514
        %v1599 = vpop.f32.mrf.mxu0
        %v1600 = vadd.f32 %v1482, %v1599
        %v1601 = vpop.f32.mrf.mxu0
        %1602 = vmatprep.mubr.f32.mxu0 0.0
        %1603 = vmatmul.mubr.f32.gmra.mxu0 %v1516
        %v1604 = vpop.f32.mrf.mxu0
        %v1605 = vadd.f32 %v1486, %v1604
        %v1606 = vpop.f32.mrf.mxu0
        %1607 = vmatprep.mubr.f32.mxu0 0.0
        %1608 = vmatmul.mubr.f32.gmra.mxu0 %v1518
        %v1609 = vpop.f32.mrf.mxu0
        %v1610 = vadd.f32 %v1490, %v1609
        %v1611 = vpop.f32.mrf.mxu0
        %1612 = vmatprep.mubr.f32.mxu0 0.0
        %1613 = vmatmul.mubr.f32.gmra.mxu0 %v1520
        %v1614 = vpop.f32.mrf.mxu0
        %v1615 = vadd.f32 %v1495, %v1614
        %v1616 = vpop.f32.mrf.mxu0
        %1617 = vmatprep.mubr.f32.mxu0 0.0
        %1618 = vmatmul.mubr.f32.gmra.mxu0 %v1522
        %v1619 = vpop.f32.mrf.mxu0
        %v1620 = vadd.f32 %v1500, %v1619
        %v1621 = vpop.f32.mrf.mxu0
        %1622 = vmatprep.mubr.f32.mxu0 0.0
        %1623 = vmatmul.mubr.f32.gmra.mxu0 %v1524
        %v1624 = vpop.f32.mrf.mxu0
        %v1625 = vadd.f32 %v1505, %v1624
        %v1626 = vpop.f32.mrf.mxu0
        %1627 = vmatprep.mubr.f32.mxu0 0.0
        %1628 = vmatmul.mubr.f32.gmra.mxu0 %v1526
        %v1629 = vpop.f32.mrf.mxu0
        %v1630 = vadd.f32 %v1510, %v1629
        %v1631 = vpop.f32.mrf.mxu0
        %1632 = vdwg.mxu0
        %v1633 = vmax.f32 %v1595, 0.0
        %v1634 = vmax.f32 %v1600, 0.0
        %v1635 = vmax.f32 %v1605, 0.0
        %v1636 = vmax.f32 %v1610, 0.0
        %v1637 = vmax.f32 %v1615, 0.0
        %v1638 = vmax.f32 %v1620, 0.0
        %v1639 = vmax.f32 %v1625, 0.0
        %v1640 = vmax.f32 %v1630, 0.0
        %1641 = vset.pattern.permute.xlu0 34
        %1642 = vperm.xlu0 %1641, %v1249
        %v1643 = vpop.permute.xlu0 %1642
        %1645 = vset.pattern.permute.xlu0 34
        %1646 = vperm.xlu0 %1645, %v1250
        %v1647 = vpop.permute.xlu0 %1646
        %1649 = vset.pattern.permute.xlu0 34
        %1650 = vperm.xlu0 %1649, %v1251
        %v1651 = vpop.permute.xlu0 %1650
        %1653 = vset.pattern.permute.xlu0 34
        %1654 = vperm.xlu0 %1653, %v1252
        %v1655 = vpop.permute.xlu0 %1654
        %1657 = vrot.lane.b32.xlu0 %v1249, 64
        %v1658 = vpop.permute.xlu0 %1657
        %1659 = vrot.lane.b32.xlu0 %v1250, 64
        %v1660 = vpop.permute.xlu0 %1659
        %1661 = vrot.lane.b32.xlu0 %v1251, 64
        %v1662 = vpop.permute.xlu0 %1661
        %1663 = vrot.lane.b32.xlu0 %v1252, 64
        %v1664 = vpop.permute.xlu0 %1663
        %v1665 = vsel %vm1150, %v1658, 0
        %v1667 = vsel %vm1150, %v1660, 0
        %v1669 = vsel %vm1150, %v1662, 0
        %v1671 = vsel %vm1150, %v1664, 0
        %1673 = vmatprep.subr.mxu0 0.0
        %1674 = vmatpush1.msra.mxu0 0.0
        %1675 = vmatprep.subr.mxu0 0.0
        %1676 = vmatpush1.msra.mxu0 0.0
        %1677 = vmatprep.subr.mxu0 0.0
        %1678 = vmatpush1.msra.mxu0 0.0
        %1679 = vmatprep.subr.mxu0 0.0
        %1680 = vmatpush1.msra.mxu0 0.0
        %1681 = vmatprep.subr.mxu0 0.0
        %1682 = vmatpush1.msra.mxu0 0.0
        %1683 = vmatprep.subr.mxu0 0.0
        %1684 = vmatpush1.msra.mxu0 0.0
        %1685 = vmatprep.subr.mxu0 0.0
        %1686 = vmatpush1.msra.mxu0 0.0
        %1687 = vmatprep.subr.mxu0 0.0
        %1688 = vmatpush1.msra.mxu0 0.0
        %1689 = vmatprep.subr.mxu0 0.0
        %1690 = vmatpush1.msra.mxu0 %v1640
        %1691 = vmatprep.subr.mxu0 0.0
        %1692 = vmatpush1.msra.mxu0 %v1639
        %1693 = vmatprep.subr.mxu0 0.0
        %1694 = vmatpush1.msra.mxu0 %v1638
        %1695 = vmatprep.subr.mxu0 0.0
        %1696 = vmatpush1.msra.mxu0 %v1637
        %1697 = vmatprep.subr.mxu0 0.0
        %1698 = vmatpush1.msra.mxu0 %v1636
        %1699 = vmatprep.subr.mxu0 0.0
        %1700 = vmatpush1.msra.mxu0 %v1635
        %1701 = vmatprep.subr.mxu0 0.0
        %1702 = vmatpush1.msra.mxu0 %v1634
        %1703 = vmatprep.subr.mxu0 0.0
        %1704 = vmatpush1.msra.mxu0 %v1633
        %1705 = vmatprep.subr.mxu0 0.0
        %1706 = vmatpush2.msra.mxu0 0.0
        %1707 = vmatprep.subr.mxu0 0.0
        %1708 = vmatpush2.msra.mxu0 0.0
        %1709 = vmatprep.subr.mxu0 0.0
        %1710 = vmatpush2.msra.mxu0 0.0
        %1711 = vmatprep.subr.mxu0 0.0
        %1712 = vmatpush2.msra.mxu0 0.0
        %1713 = vmatprep.subr.mxu0 0.0
        %1714 = vmatpush2.msra.mxu0 0.0
        %1715 = vmatprep.subr.mxu0 0.0
        %1716 = vmatpush2.msra.mxu0 0.0
        %1717 = vmatprep.subr.mxu0 0.0
        %1718 = vmatpush2.msra.mxu0 0.0
        %1719 = vmatprep.subr.mxu0 0.0
        %1720 = vmatpush2.msra.mxu0 0.0
        %1721 = vmatprep.subr.mxu0 0.0
        %1722 = vmatpush2.msra.mxu0 0.0
        %1723 = vmatprep.subr.mxu0 0.0
        %1724 = vmatpush2.msra.mxu0 0.0
        %1725 = vmatprep.subr.mxu0 0.0
        %1726 = vmatpush2.msra.mxu0 0.0
        %1727 = vmatprep.subr.mxu0 0.0
        %1728 = vmatpush2.msra.mxu0 0.0
        %1729 = vmatprep.subr.mxu0 0.0
        %1730 = vmatpush2.msra.mxu0 0.0
        %1731 = vmatprep.subr.mxu0 0.0
        %1732 = vmatpush2.msra.mxu0 0.0
        %1733 = vmatprep.subr.mxu0 0.0
        %1734 = vmatpush2.msra.mxu0 0.0
        %1735 = vmatprep.subr.mxu0 0.0
        %1736 = vmatpush2.msra.mxu0 0.0
        %1737 = vmatprep.mubr.f32.mxu0 0.0
        %1738 = vmatmul.mubr.f32.gmra.mxu0 %v1665
        %v1739 = vpop.f32.mrf.mxu0
        %v1740 = vadd.f32 %v1643, %v1739
        %v1741 = vpop.f32.mrf.mxu0
        %1742 = vmatprep.mubr.f32.mxu0 0.0
        %1743 = vmatmul.mubr.f32.gmra.mxu0 %v1667
        %v1744 = vpop.f32.mrf.mxu0
        %v1745 = vadd.f32 %v1647, %v1744
        %v1746 = vpop.f32.mrf.mxu0
        %1747 = vmatprep.mubr.f32.mxu0 0.0
        %1748 = vmatmul.mubr.f32.gmra.mxu0 %v1669
        %v1749 = vpop.f32.mrf.mxu0
        %v1750 = vadd.f32 %v1651, %v1749
        %v1751 = vpop.f32.mrf.mxu0
        %1752 = vmatprep.mubr.f32.mxu0 0.0
        %1753 = vmatmul.mubr.f32.gmra.mxu0 %v1671
        %v1754 = vpop.f32.mrf.mxu0
        %v1755 = vadd.f32 %v1655, %v1754
        %v1756 = vpop.f32.mrf.mxu0
        %1757 = vdwg.mxu0
        %1758 = vst [vmem:[%s369] sm:$0xff] %v1740
        %1759 = vst [vmem:[%s369 + $0x8] sm:$0xff] %v1745
        %1760 = vst [vmem:[%s369 + $0x10] sm:$0xff] %v1750
        %1761 = vst [vmem:[%s369 + $0x18] sm:$0xff] %v1755
        %s1762 = sand.u32 %s152, 1
        %s1763 = scalar_lea.sflag [#allocation5], %s1762
        %s1764 = sand.u32 %s152, 1
        %s1765 = smul.addr %s1764, 32
        %s1766 = scalar_lea.vmem [#allocation4], %s1765
        // Predicated region
        $region102: #{gnn_forward.1} parent=92 // pred_check
          %p1767 = pneg %p162
        $region103: #{gnn_forward.1} parent=92 // pred_check_branch
          %1769 = sbr.rel (%p1767) target = $region105
        $region104: #{gnn_forward.1} parent=92 // pred_region
          %s1771 = ssub.s32 512, 512
          %1772 = vsyncadd %s1763, %s1771
          %s1773 = smul.addr %s19, 128
          %s1774 = scalar_lea.hbm %s5, %s1773
          %s1775 = sshll.u32 %s1766, 4
          %s1776 = int_to_ptr.vmem [resolvable:$true] %s1775
          %1781 = dma.vmem_to_hbm [thread:$0]  %s1776, 512, %s1774, %s1763, 128, 256, 8
        $region105: #{gnn_forward.1} parent=92 // pred_fallthru
          _
      $region93: #{gnn_forward.1} parent=5 // pred_fallthru
        _
      %p1782 = scmp.le.s32.totalorder 2, %s14
      // Predicated region
      $region106: #{gnn_forward.1} parent=5 // pred_check
        %p1783 = pneg %p1782
      $region107: #{gnn_forward.1} parent=5 // pred_check_branch
        %1785 = sbr.rel (%p1783) target = $region109
      $region108: #{gnn_forward.1} parent=5 // pred_region
        %s1786 = ssub.s32 %s14, 2
        // Predicated region
        $region110: #{gnn_forward.1} parent=108 // pred_check
          %p1787 = pneg %p168
        $region111: #{gnn_forward.1} parent=108 // pred_check_branch
          %1789 = sbr.rel (%p1787) target = $region113
        $region112: #{gnn_forward.1} parent=108 // pred_region
          %s1790 = sand.u32 %s153, 1
          %s1791 = scalar_lea.sflag [#allocation5], %s1790
          %s1792 = sand.u32 %s153, 1
          %s1793 = smul.addr %s1792, 32
          %s1794 = scalar_lea.vmem [#allocation4], %s1793
          %1795 = dma.done %s1791, 512
        $region113: #{gnn_forward.1} parent=108 // pred_fallthru
          _
      $region109: #{gnn_forward.1} parent=5 // pred_fallthru
        _
    $region6: #{gnn_forward.1} parent=1 // loop_footer
      %s18 = sadd.s32 1, %s14
    $region7: #{gnn_forward.1} parent=1 // loop_footer_branch
      %13 = sbr.rel target = $region3
    $region8: #{gnn_forward.1} parent=1 // loop_exit
      _
    %1796 = vsyncpa [#allocation5], 1
    %s1797 = scalar_lea.sflag [#allocation5], 1
    %1798 = vsyncpa %s1797, 1

</llo_original>
